<compile_context>
chip_gen: v7x
topology: tpu7x:2x2x1
jax: 0.10.0
libtpu: 0.0.40
codegen_flags: <defaults>
</compile_context>

<pallas_src>
import jax
import jax.numpy as jnp
import numpy as np
from jax import lax
from jax.experimental import pallas as pl
from jax.experimental.pallas import tpu as pltpu

LANE = 128  # TPU lane width; all feature dims are padded to this in the wrapper.


# ----------------------------- kernel A: edge phase -----------------------------
def gcmp_edge_kernel(src_ref, dst_ref,                    # SMEM scalar prefetch [E_pad]
                     vc_ref, ve_ref,                       # [N_pad,128], [TE,128]
                     w1s_ref, w1d_ref, w1e_ref, b1_ref,    # msg MLP layer 1 (row-split)
                     w2_ref, b2_ref, wg_ref, bg_ref,       # msg MLP layer 2 + gate
                     wv_ref, bv_ref,                       # ve_down MLP (split, stacked)
                     f_ref, ove_ref,                        # outputs [TE,4*128], [TE,128]
                     xs_ref, xd_ref):                       # VMEM scratch [TE,128]
    te = ve_ref.shape[0]
    base = pl.program_id(0) * te

    # Row gather of src/dst node features (replaces the O(E*N) one-hot matmuls).
    def gather(e, carry):
        si = src_ref[base + e]
        di = dst_ref[base + e]
        xs_ref[pl.ds(e, 1), :] = vc_ref[pl.ds(si, 1), :]
        xd_ref[pl.ds(e, 1), :] = vc_ref[pl.ds(di, 1), :]
        return carry

    lax.fori_loop(0, te, gather, 0, unroll=True)

    xs = xs_ref[...]
    xd = xd_ref[...]
    ve = ve_ref[...]

    # msg MLP layer 1: concat([src, dst, ve]) @ W1  ==  sum of split-weight matmuls.
    h = (jnp.dot(xs, w1s_ref[...], preferred_element_type=jnp.float32)
         + jnp.dot(xd, w1d_ref[...], preferred_element_type=jnp.float32)
         + jnp.dot(ve, w1e_ref[...], preferred_element_type=jnp.float32)
         + b1_ref[...])
    h = jnp.maximum(h, 0.0)

    # msg MLP layer 2: four 128-aligned chunks + a lane-replicated gate column.
    y = jnp.dot(h, w2_ref[...], preferred_element_type=jnp.float32) + b2_ref[...]   # [TE, 4*128]
    k = jax.nn.sigmoid(
        jnp.dot(h, wg_ref[...], preferred_element_type=jnp.float32) + bg_ref[...])  # [TE, 128]

    f1 = y[:, 0 * LANE:1 * LANE] * k
    f2 = y[:, 1 * LANE:2 * LANE] * k
    f3 = y[:, 2 * LANE:3 * LANE] * k
    f4 = y[:, 3 * LANE:4 * LANE] * k

    f_ref[:, 0 * LANE:1 * LANE] = f1
    f_ref[:, 1 * LANE:2 * LANE] = f2
    f_ref[:, 2 * LANE:3 * LANE] = f3
    f_ref[:, 3 * LANE:4 * LANE] = f4

    # ve_down MLP on concat([f1..f4])  ==  sum of split-weight matmuls.
    ove_ref[...] = (jnp.dot(f1, wv_ref[0], preferred_element_type=jnp.float32)
                    + jnp.dot(f2, wv_ref[1], preferred_element_type=jnp.float32)
                    + jnp.dot(f3, wv_ref[2], preferred_element_type=jnp.float32)
                    + jnp.dot(f4, wv_ref[3], preferred_element_type=jnp.float32)
                    + bv_ref[...])


# ----------------------------- kernel B: node phase -----------------------------
def gcmp_node_kernel(rowptr_ref,                           # SMEM scalar prefetch [N_pad+1]
                     vc_ref, f_ref, wr_ref, br_ref,        # [TN,128],[E_pad,4*128],[5,128,128],[1,128]
                     out_ref,                              # [TN,128]
                     sum_ref, max_ref, min_ref, mean_ref):  # VMEM scratch [TN,128] each
    tn = vc_ref.shape[0]
    n0 = pl.program_id(0) * tn

    def node_body(i, carry):
        start = rowptr_ref[n0 + i]
        end = rowptr_ref[n0 + i + 1]

        init = (jnp.zeros((1, LANE), jnp.float32),
                jnp.full((1, LANE), -jnp.inf, jnp.float32),
                jnp.full((1, LANE), jnp.inf, jnp.float32),
                jnp.zeros((1, LANE), jnp.float32))

        def edge_body(e, c):
            s1, mx, mn, s4 = c
            row = f_ref[pl.ds(e, 1), :]                    # [1, 4*128], lane-aligned chunks
            return (s1 + row[:, 0 * LANE:1 * LANE],
                    jnp.maximum(mx, row[:, 1 * LANE:2 * LANE]),
                    jnp.minimum(mn, row[:, 2 * LANE:3 * LANE]),
                    s4 + row[:, 3 * LANE:4 * LANE])

        s1, mx, mn, s4 = lax.fori_loop(start, end, edge_body, init)

        deg = (end - start).astype(jnp.float32)
        has = deg > 0.0
        inv_deg = jnp.where(has, 1.0 / jnp.maximum(deg, 1.0), 0.0)

        sum_ref[pl.ds(i, 1), :] = s1
        max_ref[pl.ds(i, 1), :] = jnp.where(has, mx, 0.0)   # DGL zero-fill for isolated nodes
        min_ref[pl.ds(i, 1), :] = jnp.where(has, mn, 0.0)
        mean_ref[pl.ds(i, 1), :] = s4 * inv_deg
        return carry

    lax.fori_loop(0, tn, node_body, 0)

    # reduce MLP: concat([vc, sum, max, min, mean]) @ Wr  ==  sum of split-weight matmuls.
    out_ref[...] = (jnp.dot(vc_ref[...], wr_ref[0], preferred_element_type=jnp.float32)
                    + jnp.dot(sum_ref[...], wr_ref[1], preferred_element_type=jnp.float32)
                    + jnp.dot(max_ref[...], wr_ref[2], preferred_element_type=jnp.float32)
                    + jnp.dot(min_ref[...], wr_ref[3], preferred_element_type=jnp.float32)
                    + jnp.dot(mean_ref[...], wr_ref[4], preferred_element_type=jnp.float32)
                    + br_ref[...])


# ----------------------------- wrapper ------------------------------------------
def _pad2(a, rows, cols):
    a = jnp.asarray(a, jnp.float32)
    return jnp.zeros((rows, cols), jnp.float32).at[:a.shape[0], :a.shape[1]].set(a)


def _prepare_params(params, n_in, n_out):
    w1, b1 = params["w1"], params["b1"]
    w2, b2 = params["w2"], params["b2"]
    wr, br = params["wr"], params["br"]
    wv, bv = params["wv"], params["bv"]

    # msg MLP layer 1, split by concat segment (src | dst | edge), padded to 128.
    w1s = _pad2(w1[0 * n_in:1 * n_in, :], LANE, LANE)
    w1d = _pad2(w1[1 * n_in:2 * n_in, :], LANE, LANE)
    w1e = _pad2(w1[2 * n_in:3 * n_in, :], LANE, LANE)
    b1p = _pad2(b1, 1, LANE)

    # Gate column (index 0 of the msg-MLP output) -> lane-replicated weight/bias.
    wgp = _pad2(jnp.tile(w2[:, 0:1], (1, LANE)), LANE, LANE)
    bgp = jnp.full((1, LANE), b2[0, 0], jnp.float32)

    # f1..f4 chunks of layer 2, each padded to 128 lanes (aligned slices in-kernel).
    w2f = jnp.concatenate(
        [_pad2(w2[:, 1 + i * n_out:1 + (i + 1) * n_out], LANE, LANE) for i in range(4)], axis=1)
    b2f = jnp.concatenate(
        [_pad2(b2[:, 1 + i * n_out:1 + (i + 1) * n_out], 1, LANE) for i in range(4)], axis=1)

    # reduce MLP, split by concat segment (vc | sum | max | min | mean).
    sizes = [n_in, n_out, n_out, n_out, n_out]
    offs = np.cumsum([0] + sizes)
    wrp = jnp.stack([_pad2(wr[offs[i]:offs[i + 1], :], LANE, LANE) for i in range(5)])
    brp = _pad2(br, 1, LANE)

    # ve_down MLP, split by concat segment (f1 | f2 | f3 | f4).
    wvp = jnp.stack([_pad2(wv[i * n_out:(i + 1) * n_out, :], LANE, LANE) for i in range(4)])
    bvp = _pad2(bv, 1, LANE)

    return w1s, w1d, w1e, b1p, w2f, b2f, wgp, bgp, wvp, bvp, wrp, brp


def gcmp_forward(in_vc, in_ve, src_idx, dst_idx, params, n_out,
                 edge_tile=8, node_tile=8):
    N, n_in = in_vc.shape
    E = in_ve.shape[0]
    N_pad = ((N + node_tile - 1) // node_tile) * node_tile
    E_pad = ((E + edge_tile - 1) // edge_tile) * edge_tile

    (w1s, w1d, w1e, b1p, w2f, b2f, wgp, bgp, wvp, bvp, wrp, brp) = _prepare_params(
        params, n_in, n_out)

    # Sort edges by destination node so per-node aggregation reads a contiguous
    # (CSR) edge range.  Cheap O(E) wrapper preprocessing.
    order = jnp.argsort(dst_idx)
    inv_order = jnp.argsort(order)
    src_s = src_idx[order].astype(jnp.int32)
    dst_s = dst_idx[order].astype(jnp.int32)
    ve_s = in_ve[order]

    vcp = _pad2(in_vc, N_pad, LANE)
    vep = _pad2(ve_s, E_pad, LANE)
    # Padded edges point at node 0 but are excluded from every CSR range.
    srcp = jnp.zeros((E_pad,), jnp.int32).at[:E].set(src_s)
    dstp = jnp.zeros((E_pad,), jnp.int32).at[:E].set(dst_s)
    row_ptr = jnp.searchsorted(
        dst_s, jnp.arange(N_pad + 1, dtype=jnp.int32)).astype(jnp.int32)

    cparams = pltpu.CompilerParams(
        dimension_semantics=("parallel",),
        vmem_limit_bytes=32 * 1024 * 1024,
    )

    bcast2 = lambda t, s, d: (0, 0)   # grid-invariant blocks (kernel A)

    # ---- kernel A: per-edge message MLP + gating + ve_down MLP ------------------
    f_all, ove_pad = pl.pallas_call(
        gcmp_edge_kernel,
        grid_spec=pltpu.PrefetchScalarGridSpec(
            num_scalar_prefetch=2,
            grid=(E_pad // edge_tile,),
            in_specs=[
                pl.BlockSpec((N_pad, LANE), bcast2),                       # node table (resident)
                pl.BlockSpec((edge_tile, LANE), lambda t, s, d: (t, 0)),   # edge features tile
                pl.BlockSpec((LANE, LANE), bcast2),                        # w1 (src rows)
                pl.BlockSpec((LANE, LANE), bcast2),                        # w1 (dst rows)
                pl.BlockSpec((LANE, LANE), bcast2),                        # w1 (edge rows)
                pl.BlockSpec((1, LANE), bcast2),                           # b1
                pl.BlockSpec((LANE, 4 * LANE), bcast2),                    # w2 f-chunks
                pl.BlockSpec((1, 4 * LANE), bcast2),                       # b2 f-chunks
                pl.BlockSpec((LANE, LANE), bcast2),                        # gate weight (replicated)
                pl.BlockSpec((1, LANE), bcast2),                           # gate bias
                pl.BlockSpec((4, LANE, LANE), lambda t, s, d: (0, 0, 0)),  # wv (stacked)
                pl.BlockSpec((1, LANE), bcast2),                           # bv
            ],
            out_specs=[
                pl.BlockSpec((edge_tile, 4 * LANE), lambda t, s, d: (t, 0)),
                pl.BlockSpec((edge_tile, LANE), lambda t, s, d: (t, 0)),
            ],
            scratch_shapes=[pltpu.VMEM((edge_tile, LANE), jnp.float32),
                            pltpu.VMEM((edge_tile, LANE), jnp.float32)],
        ),
        out_shape=(jax.ShapeDtypeStruct((E_pad, 4 * LANE), jnp.float32),
                   jax.ShapeDtypeStruct((E_pad, LANE), jnp.float32)),
        compiler_params=cparams,
    )(srcp, dstp, vcp, vep, w1s, w1d, w1e, b1p, w2f, b2f, wgp, bgp, wvp, bvp)

    # ---- kernel B: CSR segment sum/max/min/mean + reduce MLP --------------------
    # TODO(synk): for very large E, stream each node-tile's contiguous edge range
    #   from HBM with manual make_async_copy instead of keeping f_all VMEM-resident.
    out_vc_pad = pl.pallas_call(
        gcmp_node_kernel,
        grid_spec=pltpu.PrefetchScalarGridSpec(
            num_scalar_prefetch=1,
            grid=(N_pad // node_tile,),
            in_specs=[
                pl.BlockSpec((node_tile, LANE), lambda t, rp: (t, 0)),     # node features tile
                pl.BlockSpec((E_pad, 4 * LANE), lambda t, rp: (0, 0)),     # gated messages f1..f4
                pl.BlockSpec((5, LANE, LANE), lambda t, rp: (0, 0, 0)),    # wr (stacked)
                pl.BlockSpec((1, LANE), lambda t, rp: (0, 0)),             # br
            ],
            out_specs=pl.BlockSpec((node_tile, LANE), lambda t, rp: (t, 0)),
            scratch_shapes=[pltpu.VMEM((node_tile, LANE), jnp.float32)
                            for _ in range(4)],
        ),
        out_shape=jax.ShapeDtypeStruct((N_pad, LANE), jnp.float32),
        compiler_params=cparams,
    )(row_ptr, vcp, f_all, wrp, brp)

    out_vc = out_vc_pad[:N, :n_out]
    out_ve = ove_pad[:E, :n_out][inv_order]   # undo the dst-sort for edge outputs
    return out_vc, out_ve


# ----------------------------- pure-JAX reference --------------------------------
def gcmp_reference(in_vc, in_ve, src_idx, dst_idx, params, n_out):
    xs = in_vc[src_idx]
    xd = in_vc[dst_idx]
    x = jnp.concatenate([xs, xd, in_ve], axis=1)
    h = jnp.maximum(x @ params["w1"] + params["b1"], 0.0)
    y = h @ params["w2"] + params["b2"]
    k = jax.nn.sigmoid(y[:, :1])
    f = [y[:, 1 + i * n_out:1 + (i + 1) * n_out] * k for i in range(4)]
    N = in_vc.shape[0]
    deg = jax.ops.segment_sum(jnp.ones((in_ve.shape[0],)), dst_idx, N)
    has = deg > 0
    agg_sum = jax.ops.segment_sum(f[0], dst_idx, N)
    agg_max = jnp.where(has[:, None], jax.ops.segment_max(f[1], dst_idx, N), 0.0)
    agg_min = jnp.where(has[:, None], jax.ops.segment_min(f[2], dst_idx, N), 0.0)
    agg_mean = jnp.where(has[:, None],
                         jax.ops.segment_sum(f[3], dst_idx, N)
                         / jnp.maximum(deg, 1.0)[:, None], 0.0)
    xr = jnp.concatenate([in_vc, agg_sum, agg_max, agg_min, agg_mean], axis=1)
    out_vc = xr @ params["wr"] + params["br"]
    out_ve = jnp.concatenate(f, axis=1) @ params["wv"] + params["bv"]
    return out_vc, out_ve


if __name__ == "__main__":
    n_in, n_out = 4, 8
    N, E = 8, 16

    key = jax.random.PRNGKey(0)
    keys = jax.random.split(key, 12)

    params = {
        "w1": 0.1 * jax.random.normal(keys[0], (3 * n_in, 3 * n_out), jnp.float32),
        "b1": 0.1 * jax.random.normal(keys[1], (1, 3 * n_out), jnp.float32),
        "w2": 0.1 * jax.random.normal(keys[2], (3 * n_out, 4 * n_out + 1), jnp.float32),
        "b2": 0.1 * jax.random.normal(keys[3], (1, 4 * n_out + 1), jnp.float32),
        "wr": 0.1 * jax.random.normal(keys[4], (4 * n_out + n_in, n_out), jnp.float32),
        "br": 0.1 * jax.random.normal(keys[5], (1, n_out), jnp.float32),
        "wv": 0.1 * jax.random.normal(keys[6], (4 * n_out, n_out), jnp.float32),
        "bv": 0.1 * jax.random.normal(keys[7], (1, n_out), jnp.float32),
    }

    in_vc = jax.random.normal(keys[8], (N, n_in), jnp.float32)
    in_ve = jax.random.normal(keys[9], (E, n_in), jnp.float32)
    # deterministic synthetic edge list (every node gets at least one in-edge)
    src_idx = jnp.arange(E, dtype=jnp.int32) % N
    dst_idx = (3 * jnp.arange(E, dtype=jnp.int32) + 1) % N

    out_vc, out_ve = gcmp_forward(in_vc, in_ve, src_idx, dst_idx, params, n_out,
                                  edge_tile=8, node_tile=8)
    jax.block_until_ready((out_vc, out_ve))

    ref_vc, ref_ve = gcmp_reference(in_vc, in_ve, src_idx, dst_idx, params, n_out)
    np.testing.assert_allclose(np.asarray(out_vc), np.asarray(ref_vc), rtol=1e-5, atol=1e-5)
    np.testing.assert_allclose(np.asarray(out_ve), np.asarray(ref_ve), rtol=1e-5, atol=1e-5)

    print("KERNEL_OK")
</pallas_src>

<mosaic_0001>
module attributes {stable_mosaic.version = 11 : i64} {
  func.func @gcmp_edge_kernel(%arg0: i32, %arg1: memref<16xi32, #tpu.memory_space<smem>>, %arg2: memref<16xi32, #tpu.memory_space<smem>>, %arg3: memref<8x128xf32, #tpu.memory_space<vmem>>, %arg4: memref<8x128xf32, #tpu.memory_space<vmem>>, %arg5: memref<128x128xf32, #tpu.memory_space<vmem>>, %arg6: memref<128x128xf32, #tpu.memory_space<vmem>>, %arg7: memref<128x128xf32, #tpu.memory_space<vmem>>, %arg8: memref<1x128xf32, #tpu.memory_space<vmem>>, %arg9: memref<128x512xf32, #tpu.memory_space<vmem>>, %arg10: memref<1x512xf32, #tpu.memory_space<vmem>>, %arg11: memref<128x128xf32, #tpu.memory_space<vmem>>, %arg12: memref<1x128xf32, #tpu.memory_space<vmem>>, %arg13: memref<4x128x128xf32, #tpu.memory_space<vmem>>, %arg14: memref<1x128xf32, #tpu.memory_space<vmem>>, %arg15: memref<8x512xf32, #tpu.memory_space<vmem>>, %arg16: memref<8x128xf32, #tpu.memory_space<vmem>>, %arg17: memref<8x128xf32, #tpu.memory_space<vmem>>, %arg18: memref<8x128xf32, #tpu.memory_space<vmem>>) attributes {dimension_semantics = [#tpu.dimension_semantics<parallel>], iteration_bounds = array<i64: 2>, scalar_prefetch = 2 : i64, scratch_operands = 2 : i64, tpu.core_type = #tpu.core_type<tc>, window_params = [{pipeline_mode = #tpu.pipeline_mode<synchronous>, transform_indices = @transform_0, window_bounds = array<i64: 8, 128>}, {transform_indices = @transform_1, window_bounds = array<i64: 8, 128>}, {pipeline_mode = #tpu.pipeline_mode<synchronous>, transform_indices = @transform_2, window_bounds = array<i64: 128, 128>}, {pipeline_mode = #tpu.pipeline_mode<synchronous>, transform_indices = @transform_3, window_bounds = array<i64: 128, 128>}, {pipeline_mode = #tpu.pipeline_mode<synchronous>, transform_indices = @transform_4, window_bounds = array<i64: 128, 128>}, {pipeline_mode = #tpu.pipeline_mode<synchronous>, transform_indices = @transform_5, window_bounds = array<i64: 1, 128>}, {pipeline_mode = #tpu.pipeline_mode<synchronous>, transform_indices = @transform_6, window_bounds = array<i64: 128, 512>}, {pipeline_mode = #tpu.pipeline_mode<synchronous>, transform_indices = @transform_7, window_bounds = array<i64: 1, 512>}, {pipeline_mode = #tpu.pipeline_mode<synchronous>, transform_indices = @transform_8, window_bounds = array<i64: 128, 128>}, {pipeline_mode = #tpu.pipeline_mode<synchronous>, transform_indices = @transform_9, window_bounds = array<i64: 1, 128>}, {pipeline_mode = #tpu.pipeline_mode<synchronous>, transform_indices = @transform_10, window_bounds = array<i64: 4, 128, 128>}, {pipeline_mode = #tpu.pipeline_mode<synchronous>, transform_indices = @transform_11, window_bounds = array<i64: 1, 128>}, {transform_indices = @transform_12, window_bounds = array<i64: 8, 512>}, {transform_indices = @transform_13, window_bounds = array<i64: 8, 128>}]} {
    %c8_i32 = arith.constant 8 : i32
    %0 = arith.muli %arg0, %c8_i32 : i32
    %c0_i32 = arith.constant 0 : i32
    %1 = arith.addi %0, %c0_i32 : i32
    %2 = arith.index_cast %1 : i32 to index
    %3 = memref.load %arg1[%2] : memref<16xi32, #tpu.memory_space<smem>>
    %4 = arith.addi %0, %c0_i32 : i32
    %5 = arith.index_cast %4 : i32 to index
    %6 = memref.load %arg2[%5] : memref<16xi32, #tpu.memory_space<smem>>
    %7 = arith.index_cast %3 : i32 to index
    %c0 = arith.constant 0 : index
    %8 = vector.load %arg3[%7, %c0] : memref<8x128xf32, #tpu.memory_space<vmem>>, vector<1x128xf32>
    %9 = arith.index_cast %c0_i32 : i32 to index
    %c0_0 = arith.constant 0 : index
    %10 = vector.load %arg17[%9, %c0_0] : memref<8x128xf32, #tpu.memory_space<vmem>>, vector<1x128xf32>
    tpu.vector_store %arg17[%9, %c0_0], %8 {strides = array<i32>} : memref<8x128xf32, #tpu.memory_space<vmem>>, vector<1x128xf32>,
    %11 = arith.index_cast %6 : i32 to index
    %c0_1 = arith.constant 0 : index
    %12 = vector.load %arg3[%11, %c0_1] : memref<8x128xf32, #tpu.memory_space<vmem>>, vector<1x128xf32>
    %13 = arith.index_cast %c0_i32 : i32 to index
    %c0_2 = arith.constant 0 : index
    %14 = vector.load %arg18[%13, %c0_2] : memref<8x128xf32, #tpu.memory_space<vmem>>, vector<1x128xf32>
    tpu.vector_store %arg18[%13, %c0_2], %12 {strides = array<i32>} : memref<8x128xf32, #tpu.memory_space<vmem>>, vector<1x128xf32>,
    %c1_i32 = arith.constant 1 : i32
    %15 = arith.addi %0, %c1_i32 : i32
    %16 = arith.index_cast %15 : i32 to index
    %17 = memref.load %arg1[%16] : memref<16xi32, #tpu.memory_space<smem>>
    %18 = arith.addi %0, %c1_i32 : i32
    %19 = arith.index_cast %18 : i32 to index
    %20 = memref.load %arg2[%19] : memref<16xi32, #tpu.memory_space<smem>>
    %21 = arith.index_cast %17 : i32 to index
    %c0_3 = arith.constant 0 : index
    %22 = vector.load %arg3[%21, %c0_3] : memref<8x128xf32, #tpu.memory_space<vmem>>, vector<1x128xf32>
    %23 = arith.index_cast %c1_i32 : i32 to index
    %c0_4 = arith.constant 0 : index
    %24 = vector.load %arg17[%23, %c0_4] : memref<8x128xf32, #tpu.memory_space<vmem>>, vector<1x128xf32>
    tpu.vector_store %arg17[%23, %c0_4], %22 {strides = array<i32>} : memref<8x128xf32, #tpu.memory_space<vmem>>, vector<1x128xf32>,
    %25 = arith.index_cast %20 : i32 to index
    %c0_5 = arith.constant 0 : index
    %26 = vector.load %arg3[%25, %c0_5] : memref<8x128xf32, #tpu.memory_space<vmem>>, vector<1x128xf32>
    %27 = arith.index_cast %c1_i32 : i32 to index
    %c0_6 = arith.constant 0 : index
    %28 = vector.load %arg18[%27, %c0_6] : memref<8x128xf32, #tpu.memory_space<vmem>>, vector<1x128xf32>
    tpu.vector_store %arg18[%27, %c0_6], %26 {strides = array<i32>} : memref<8x128xf32, #tpu.memory_space<vmem>>, vector<1x128xf32>,
    %c2_i32 = arith.constant 2 : i32
    %29 = arith.addi %0, %c2_i32 : i32
    %30 = arith.index_cast %29 : i32 to index
    %31 = memref.load %arg1[%30] : memref<16xi32, #tpu.memory_space<smem>>
    %32 = arith.addi %0, %c2_i32 : i32
    %33 = arith.index_cast %32 : i32 to index
    %34 = memref.load %arg2[%33] : memref<16xi32, #tpu.memory_space<smem>>
    %35 = arith.index_cast %31 : i32 to index
    %c0_7 = arith.constant 0 : index
    %36 = vector.load %arg3[%35, %c0_7] : memref<8x128xf32, #tpu.memory_space<vmem>>, vector<1x128xf32>
    %37 = arith.index_cast %c2_i32 : i32 to index
    %c0_8 = arith.constant 0 : index
    %38 = vector.load %arg17[%37, %c0_8] : memref<8x128xf32, #tpu.memory_space<vmem>>, vector<1x128xf32>
    tpu.vector_store %arg17[%37, %c0_8], %36 {strides = array<i32>} : memref<8x128xf32, #tpu.memory_space<vmem>>, vector<1x128xf32>,
    %39 = arith.index_cast %34 : i32 to index
    %c0_9 = arith.constant 0 : index
    %40 = vector.load %arg3[%39, %c0_9] : memref<8x128xf32, #tpu.memory_space<vmem>>, vector<1x128xf32>
    %41 = arith.index_cast %c2_i32 : i32 to index
    %c0_10 = arith.constant 0 : index
    %42 = vector.load %arg18[%41, %c0_10] : memref<8x128xf32, #tpu.memory_space<vmem>>, vector<1x128xf32>
    tpu.vector_store %arg18[%41, %c0_10], %40 {strides = array<i32>} : memref<8x128xf32, #tpu.memory_space<vmem>>, vector<1x128xf32>,
    %c3_i32 = arith.constant 3 : i32
    %43 = arith.addi %0, %c3_i32 : i32
    %44 = arith.index_cast %43 : i32 to index
    %45 = memref.load %arg1[%44] : memref<16xi32, #tpu.memory_space<smem>>
    %46 = arith.addi %0, %c3_i32 : i32
    %47 = arith.index_cast %46 : i32 to index
    %48 = memref.load %arg2[%47] : memref<16xi32, #tpu.memory_space<smem>>
    %49 = arith.index_cast %45 : i32 to index
    %c0_11 = arith.constant 0 : index
    %50 = vector.load %arg3[%49, %c0_11] : memref<8x128xf32, #tpu.memory_space<vmem>>, vector<1x128xf32>
    %51 = arith.index_cast %c3_i32 : i32 to index
    %c0_12 = arith.constant 0 : index
    %52 = vector.load %arg17[%51, %c0_12] : memref<8x128xf32, #tpu.memory_space<vmem>>, vector<1x128xf32>
    tpu.vector_store %arg17[%51, %c0_12], %50 {strides = array<i32>} : memref<8x128xf32, #tpu.memory_space<vmem>>, vector<1x128xf32>,
    %53 = arith.index_cast %48 : i32 to index
    %c0_13 = arith.constant 0 : index
    %54 = vector.load %arg3[%53, %c0_13] : memref<8x128xf32, #tpu.memory_space<vmem>>, vector<1x128xf32>
    %55 = arith.index_cast %c3_i32 : i32 to index
    %c0_14 = arith.constant 0 : index
    %56 = vector.load %arg18[%55, %c0_14] : memref<8x128xf32, #tpu.memory_space<vmem>>, vector<1x128xf32>
    tpu.vector_store %arg18[%55, %c0_14], %54 {strides = array<i32>} : memref<8x128xf32, #tpu.memory_space<vmem>>, vector<1x128xf32>,
    %c4_i32 = arith.constant 4 : i32
    %57 = arith.addi %0, %c4_i32 : i32
    %58 = arith.index_cast %57 : i32 to index
    %59 = memref.load %arg1[%58] : memref<16xi32, #tpu.memory_space<smem>>
    %60 = arith.addi %0, %c4_i32 : i32
    %61 = arith.index_cast %60 : i32 to index
    %62 = memref.load %arg2[%61] : memref<16xi32, #tpu.memory_space<smem>>
    %63 = arith.index_cast %59 : i32 to index
    %c0_15 = arith.constant 0 : index
    %64 = vector.load %arg3[%63, %c0_15] : memref<8x128xf32, #tpu.memory_space<vmem>>, vector<1x128xf32>
    %65 = arith.index_cast %c4_i32 : i32 to index
    %c0_16 = arith.constant 0 : index
    %66 = vector.load %arg17[%65, %c0_16] : memref<8x128xf32, #tpu.memory_space<vmem>>, vector<1x128xf32>
    tpu.vector_store %arg17[%65, %c0_16], %64 {strides = array<i32>} : memref<8x128xf32, #tpu.memory_space<vmem>>, vector<1x128xf32>,
    %67 = arith.index_cast %62 : i32 to index
    %c0_17 = arith.constant 0 : index
    %68 = vector.load %arg3[%67, %c0_17] : memref<8x128xf32, #tpu.memory_space<vmem>>, vector<1x128xf32>
    %69 = arith.index_cast %c4_i32 : i32 to index
    %c0_18 = arith.constant 0 : index
    %70 = vector.load %arg18[%69, %c0_18] : memref<8x128xf32, #tpu.memory_space<vmem>>, vector<1x128xf32>
    tpu.vector_store %arg18[%69, %c0_18], %68 {strides = array<i32>} : memref<8x128xf32, #tpu.memory_space<vmem>>, vector<1x128xf32>,
    %c5_i32 = arith.constant 5 : i32
    %71 = arith.addi %0, %c5_i32 : i32
    %72 = arith.index_cast %71 : i32 to index
    %73 = memref.load %arg1[%72] : memref<16xi32, #tpu.memory_space<smem>>
    %74 = arith.addi %0, %c5_i32 : i32
    %75 = arith.index_cast %74 : i32 to index
    %76 = memref.load %arg2[%75] : memref<16xi32, #tpu.memory_space<smem>>
    %77 = arith.index_cast %73 : i32 to index
    %c0_19 = arith.constant 0 : index
    %78 = vector.load %arg3[%77, %c0_19] : memref<8x128xf32, #tpu.memory_space<vmem>>, vector<1x128xf32>
    %79 = arith.index_cast %c5_i32 : i32 to index
    %c0_20 = arith.constant 0 : index
    %80 = vector.load %arg17[%79, %c0_20] : memref<8x128xf32, #tpu.memory_space<vmem>>, vector<1x128xf32>
    tpu.vector_store %arg17[%79, %c0_20], %78 {strides = array<i32>} : memref<8x128xf32, #tpu.memory_space<vmem>>, vector<1x128xf32>,
    %81 = arith.index_cast %76 : i32 to index
    %c0_21 = arith.constant 0 : index
    %82 = vector.load %arg3[%81, %c0_21] : memref<8x128xf32, #tpu.memory_space<vmem>>, vector<1x128xf32>
    %83 = arith.index_cast %c5_i32 : i32 to index
    %c0_22 = arith.constant 0 : index
    %84 = vector.load %arg18[%83, %c0_22] : memref<8x128xf32, #tpu.memory_space<vmem>>, vector<1x128xf32>
    tpu.vector_store %arg18[%83, %c0_22], %82 {strides = array<i32>} : memref<8x128xf32, #tpu.memory_space<vmem>>, vector<1x128xf32>,
    %c6_i32 = arith.constant 6 : i32
    %85 = arith.addi %0, %c6_i32 : i32
    %86 = arith.index_cast %85 : i32 to index
    %87 = memref.load %arg1[%86] : memref<16xi32, #tpu.memory_space<smem>>
    %88 = arith.addi %0, %c6_i32 : i32
    %89 = arith.index_cast %88 : i32 to index
    %90 = memref.load %arg2[%89] : memref<16xi32, #tpu.memory_space<smem>>
    %91 = arith.index_cast %87 : i32 to index
    %c0_23 = arith.constant 0 : index
    %92 = vector.load %arg3[%91, %c0_23] : memref<8x128xf32, #tpu.memory_space<vmem>>, vector<1x128xf32>
    %93 = arith.index_cast %c6_i32 : i32 to index
    %c0_24 = arith.constant 0 : index
    %94 = vector.load %arg17[%93, %c0_24] : memref<8x128xf32, #tpu.memory_space<vmem>>, vector<1x128xf32>
    tpu.vector_store %arg17[%93, %c0_24], %92 {strides = array<i32>} : memref<8x128xf32, #tpu.memory_space<vmem>>, vector<1x128xf32>,
    %95 = arith.index_cast %90 : i32 to index
    %c0_25 = arith.constant 0 : index
    %96 = vector.load %arg3[%95, %c0_25] : memref<8x128xf32, #tpu.memory_space<vmem>>, vector<1x128xf32>
    %97 = arith.index_cast %c6_i32 : i32 to index
    %c0_26 = arith.constant 0 : index
    %98 = vector.load %arg18[%97, %c0_26] : memref<8x128xf32, #tpu.memory_space<vmem>>, vector<1x128xf32>
    tpu.vector_store %arg18[%97, %c0_26], %96 {strides = array<i32>} : memref<8x128xf32, #tpu.memory_space<vmem>>, vector<1x128xf32>,
    %c7_i32 = arith.constant 7 : i32
    %99 = arith.addi %0, %c7_i32 : i32
    %100 = arith.index_cast %99 : i32 to index
    %101 = memref.load %arg1[%100] : memref<16xi32, #tpu.memory_space<smem>>
    %102 = arith.addi %0, %c7_i32 : i32
    %103 = arith.index_cast %102 : i32 to index
    %104 = memref.load %arg2[%103] : memref<16xi32, #tpu.memory_space<smem>>
    %105 = arith.index_cast %101 : i32 to index
    %c0_27 = arith.constant 0 : index
    %106 = vector.load %arg3[%105, %c0_27] : memref<8x128xf32, #tpu.memory_space<vmem>>, vector<1x128xf32>
    %107 = arith.index_cast %c7_i32 : i32 to index
    %c0_28 = arith.constant 0 : index
    %108 = vector.load %arg17[%107, %c0_28] : memref<8x128xf32, #tpu.memory_space<vmem>>, vector<1x128xf32>
    tpu.vector_store %arg17[%107, %c0_28], %106 {strides = array<i32>} : memref<8x128xf32, #tpu.memory_space<vmem>>, vector<1x128xf32>,
    %109 = arith.index_cast %104 : i32 to index
    %c0_29 = arith.constant 0 : index
    %110 = vector.load %arg3[%109, %c0_29] : memref<8x128xf32, #tpu.memory_space<vmem>>, vector<1x128xf32>
    %111 = arith.index_cast %c7_i32 : i32 to index
    %c0_30 = arith.constant 0 : index
    %112 = vector.load %arg18[%111, %c0_30] : memref<8x128xf32, #tpu.memory_space<vmem>>, vector<1x128xf32>
    tpu.vector_store %arg18[%111, %c0_30], %110 {strides = array<i32>} : memref<8x128xf32, #tpu.memory_space<vmem>>, vector<1x128xf32>,
    %c8_i32_31 = arith.constant 8 : i32
    %c0_32 = arith.constant 0 : index
    %c0_33 = arith.constant 0 : index
    %113 = vector.load %arg17[%c0_32, %c0_33] : memref<8x128xf32, #tpu.memory_space<vmem>>, vector<8x128xf32>
    %c0_34 = arith.constant 0 : index
    %c0_35 = arith.constant 0 : index
    %114 = vector.load %arg18[%c0_34, %c0_35] : memref<8x128xf32, #tpu.memory_space<vmem>>, vector<8x128xf32>
    %c0_36 = arith.constant 0 : index
    %c0_37 = arith.constant 0 : index
    %115 = vector.load %arg4[%c0_36, %c0_37] : memref<8x128xf32, #tpu.memory_space<vmem>>, vector<8x128xf32>
    %c0_38 = arith.constant 0 : index
    %c0_39 = arith.constant 0 : index
    %116 = vector.load %arg5[%c0_38, %c0_39] : memref<128x128xf32, #tpu.memory_space<vmem>>, vector<128x128xf32>
    %cst = arith.constant dense<0.000000e+00> : vector<8x128xf32>
    %117 = tpu.matmul %113, %116, %cst {dimension_numbers = #tpu.dot_dimension_numbers<[1], [0], [0], [1], [0, 0, 1, 1], [], []>} : vector<8x128xf32>, vector<128x128xf32>, vector<8x128xf32> -> vector<8x128xf32>
    %c0_40 = arith.constant 0 : index
    %c0_41 = arith.constant 0 : index
    %118 = vector.load %arg6[%c0_40, %c0_41] : memref<128x128xf32, #tpu.memory_space<vmem>>, vector<128x128xf32>
    %cst_42 = arith.constant dense<0.000000e+00> : vector<8x128xf32>
    %119 = tpu.matmul %114, %118, %cst_42 {dimension_numbers = #tpu.dot_dimension_numbers<[1], [0], [0], [1], [0, 0, 1, 1], [], []>} : vector<8x128xf32>, vector<128x128xf32>, vector<8x128xf32> -> vector<8x128xf32>
    %120 = arith.addf %117, %119 : vector<8x128xf32>
    %c0_43 = arith.constant 0 : index
    %c0_44 = arith.constant 0 : index
    %121 = vector.load %arg7[%c0_43, %c0_44] : memref<128x128xf32, #tpu.memory_space<vmem>>, vector<128x128xf32>
    %cst_45 = arith.constant dense<0.000000e+00> : vector<8x128xf32>
    %122 = tpu.matmul %115, %121, %cst_45 {dimension_numbers = #tpu.dot_dimension_numbers<[1], [0], [0], [1], [0, 0, 1, 1], [], []>} : vector<8x128xf32>, vector<128x128xf32>, vector<8x128xf32> -> vector<8x128xf32>
    %123 = arith.addf %120, %122 : vector<8x128xf32>
    %c0_46 = arith.constant 0 : index
    %c0_47 = arith.constant 0 : index
    %124 = vector.load %arg8[%c0_46, %c0_47] : memref<1x128xf32, #tpu.memory_space<vmem>>, vector<1x128xf32>
    %125 = vector.broadcast %124 : vector<1x128xf32> to vector<8x128xf32>
    %126 = arith.addf %123, %125 : vector<8x128xf32>
    %cst_48 = arith.constant 0.000000e+00 : f32
    %127 = vector.broadcast %cst_48 : f32 to vector<8x128xf32>
    %128 = arith.maximumf %126, %127 : vector<8x128xf32>
    %c0_49 = arith.constant 0 : index
    %c0_50 = arith.constant 0 : index
    %129 = vector.load %arg9[%c0_49, %c0_50] : memref<128x512xf32, #tpu.memory_space<vmem>>, vector<128x512xf32>
    %cst_51 = arith.constant dense<0.000000e+00> : vector<8x512xf32>
    %130 = tpu.matmul %128, %129, %cst_51 {dimension_numbers = #tpu.dot_dimension_numbers<[1], [0], [0], [1], [0, 0, 1, 1], [], []>} : vector<8x128xf32>, vector<128x512xf32>, vector<8x512xf32> -> vector<8x512xf32>
    %c0_52 = arith.constant 0 : index
    %c0_53 = arith.constant 0 : index
    %131 = vector.load %arg10[%c0_52, %c0_53] : memref<1x512xf32, #tpu.memory_space<vmem>>, vector<1x512xf32>
    %132 = vector.broadcast %131 : vector<1x512xf32> to vector<8x512xf32>
    %133 = arith.addf %130, %132 : vector<8x512xf32>
    %c0_54 = arith.constant 0 : index
    %c0_55 = arith.constant 0 : index
    %134 = vector.load %arg11[%c0_54, %c0_55] : memref<128x128xf32, #tpu.memory_space<vmem>>, vector<128x128xf32>
    %cst_56 = arith.constant dense<0.000000e+00> : vector<8x128xf32>
    %135 = tpu.matmul %128, %134, %cst_56 {dimension_numbers = #tpu.dot_dimension_numbers<[1], [0], [0], [1], [0, 0, 1, 1], [], []>} : vector<8x128xf32>, vector<128x128xf32>, vector<8x128xf32> -> vector<8x128xf32>
    %c0_57 = arith.constant 0 : index
    %c0_58 = arith.constant 0 : index
    %136 = vector.load %arg12[%c0_57, %c0_58] : memref<1x128xf32, #tpu.memory_space<vmem>>, vector<1x128xf32>
    %137 = vector.broadcast %136 : vector<1x128xf32> to vector<8x128xf32>
    %138 = arith.addf %135, %137 : vector<8x128xf32>
    %139 = arith.negf %138 : vector<8x128xf32>
    %140 = math.exp %139 : vector<8x128xf32>
    %cst_59 = arith.constant 1.000000e+00 : f32
    %141 = vector.broadcast %cst_59 : f32 to vector<8x128xf32>
    %142 = arith.addf %141, %140 : vector<8x128xf32>
    %143 = arith.divf %141, %142 : vector<8x128xf32>
    %144 = vector.extract_strided_slice %133 {offsets = [0, 0], sizes = [8, 128], strides = [1, 1]} : vector<8x512xf32> to vector<8x128xf32>
    %145 = arith.mulf %144, %143 : vector<8x128xf32>
    %146 = vector.extract_strided_slice %133 {offsets = [0, 128], sizes = [8, 128], strides = [1, 1]} : vector<8x512xf32> to vector<8x128xf32>
    %147 = arith.mulf %146, %143 : vector<8x128xf32>
    %148 = vector.extract_strided_slice %133 {offsets = [0, 256], sizes = [8, 128], strides = [1, 1]} : vector<8x512xf32> to vector<8x128xf32>
    %149 = arith.mulf %148, %143 : vector<8x128xf32>
    %150 = vector.extract_strided_slice %133 {offsets = [0, 384], sizes = [8, 128], strides = [1, 1]} : vector<8x512xf32> to vector<8x128xf32>
    %151 = arith.mulf %150, %143 : vector<8x128xf32>
    %c0_60 = arith.constant 0 : index
    %c0_61 = arith.constant 0 : index
    %152 = vector.load %arg15[%c0_60, %c0_61] : memref<8x512xf32, #tpu.memory_space<vmem>>, vector<8x128xf32>
    tpu.vector_store %arg15[%c0_60, %c0_61], %145 {strides = array<i32>} : memref<8x512xf32, #tpu.memory_space<vmem>>, vector<8x128xf32>,
    %c0_62 = arith.constant 0 : index
    %c128 = arith.constant 128 : index
    %153 = vector.load %arg15[%c0_62, %c128] : memref<8x512xf32, #tpu.memory_space<vmem>>, vector<8x128xf32>
    tpu.vector_store %arg15[%c0_62, %c128], %147 {strides = array<i32>} : memref<8x512xf32, #tpu.memory_space<vmem>>, vector<8x128xf32>,
    %c0_63 = arith.constant 0 : index
    %c256 = arith.constant 256 : index
    %154 = vector.load %arg15[%c0_63, %c256] : memref<8x512xf32, #tpu.memory_space<vmem>>, vector<8x128xf32>
    tpu.vector_store %arg15[%c0_63, %c256], %149 {strides = array<i32>} : memref<8x512xf32, #tpu.memory_space<vmem>>, vector<8x128xf32>,
    %c0_64 = arith.constant 0 : index
    %c384 = arith.constant 384 : index
    %155 = vector.load %arg15[%c0_64, %c384] : memref<8x512xf32, #tpu.memory_space<vmem>>, vector<8x128xf32>
    tpu.vector_store %arg15[%c0_64, %c384], %151 {strides = array<i32>} : memref<8x512xf32, #tpu.memory_space<vmem>>, vector<8x128xf32>,
    %c0_65 = arith.constant 0 : index
    %c0_66 = arith.constant 0 : index
    %c0_67 = arith.constant 0 : index
    %156 = vector.load %arg13[%c0_65, %c0_66, %c0_67] : memref<4x128x128xf32, #tpu.memory_space<vmem>>, vector<1x128x128xf32>
    %157 = vector.shape_cast %156 : vector<1x128x128xf32> to vector<128x128xf32>
    %cst_68 = arith.constant dense<0.000000e+00> : vector<8x128xf32>
    %158 = tpu.matmul %145, %157, %cst_68 {dimension_numbers = #tpu.dot_dimension_numbers<[1], [0], [0], [1], [0, 0, 1, 1], [], []>} : vector<8x128xf32>, vector<128x128xf32>, vector<8x128xf32> -> vector<8x128xf32>
    %c1 = arith.constant 1 : index
    %c0_69 = arith.constant 0 : index
    %c0_70 = arith.constant 0 : index
    %159 = vector.load %arg13[%c1, %c0_69, %c0_70] : memref<4x128x128xf32, #tpu.memory_space<vmem>>, vector<1x128x128xf32>
    %160 = vector.shape_cast %159 : vector<1x128x128xf32> to vector<128x128xf32>
    %cst_71 = arith.constant dense<0.000000e+00> : vector<8x128xf32>
    %161 = tpu.matmul %147, %160, %cst_71 {dimension_numbers = #tpu.dot_dimension_numbers<[1], [0], [0], [1], [0, 0, 1, 1], [], []>} : vector<8x128xf32>, vector<128x128xf32>, vector<8x128xf32> -> vector<8x128xf32>
    %162 = arith.addf %158, %161 : vector<8x128xf32>
    %c2 = arith.constant 2 : index
    %c0_72 = arith.constant 0 : index
    %c0_73 = arith.constant 0 : index
    %163 = vector.load %arg13[%c2, %c0_72, %c0_73] : memref<4x128x128xf32, #tpu.memory_space<vmem>>, vector<1x128x128xf32>
    %164 = vector.shape_cast %163 : vector<1x128x128xf32> to vector<128x128xf32>
    %cst_74 = arith.constant dense<0.000000e+00> : vector<8x128xf32>
    %165 = tpu.matmul %149, %164, %cst_74 {dimension_numbers = #tpu.dot_dimension_numbers<[1], [0], [0], [1], [0, 0, 1, 1], [], []>} : vector<8x128xf32>, vector<128x128xf32>, vector<8x128xf32> -> vector<8x128xf32>
    %166 = arith.addf %162, %165 : vector<8x128xf32>
    %c3 = arith.constant 3 : index
    %c0_75 = arith.constant 0 : index
    %c0_76 = arith.constant 0 : index
    %167 = vector.load %arg13[%c3, %c0_75, %c0_76] : memref<4x128x128xf32, #tpu.memory_space<vmem>>, vector<1x128x128xf32>
    %168 = vector.shape_cast %167 : vector<1x128x128xf32> to vector<128x128xf32>
    %cst_77 = arith.constant dense<0.000000e+00> : vector<8x128xf32>
    %169 = tpu.matmul %151, %168, %cst_77 {dimension_numbers = #tpu.dot_dimension_numbers<[1], [0], [0], [1], [0, 0, 1, 1], [], []>} : vector<8x128xf32>, vector<128x128xf32>, vector<8x128xf32> -> vector<8x128xf32>
    %170 = arith.addf %166, %169 : vector<8x128xf32>
    %c0_78 = arith.constant 0 : index
    %c0_79 = arith.constant 0 : index
    %171 = vector.load %arg14[%c0_78, %c0_79] : memref<1x128xf32, #tpu.memory_space<vmem>>, vector<1x128xf32>
    %172 = vector.broadcast %171 : vector<1x128xf32> to vector<8x128xf32>
    %173 = arith.addf %170, %172 : vector<8x128xf32>
    %c0_80 = arith.constant 0 : index
    %c0_81 = arith.constant 0 : index
    %174 = vector.load %arg16[%c0_80, %c0_81] : memref<8x128xf32, #tpu.memory_space<vmem>>, vector<8x128xf32>
    tpu.vector_store %arg16[%c0_80, %c0_81], %173 {strides = array<i32>} : memref<8x128xf32, #tpu.memory_space<vmem>>, vector<8x128xf32>,
    return
  }
  func.func @transform_0(%arg0: i32, %arg1: memref<16xi32, #tpu.memory_space<smem>>, %arg2: memref<16xi32, #tpu.memory_space<smem>>) -> (i32, i32) {
    %c0_i32 = arith.constant 0 : i32
    %c0_i32_0 = arith.constant 0 : i32
    %c0_i32_1 = arith.constant 0 : i32
    return %c0_i32, %c0_i32_0 : i32, i32
  }
  func.func @transform_1(%arg0: i32, %arg1: memref<16xi32, #tpu.memory_space<smem>>, %arg2: memref<16xi32, #tpu.memory_space<smem>>) -> (i32, i32) {
    %c0_i32 = arith.constant 0 : i32
    %c0_i32_0 = arith.constant 0 : i32
    return %arg0, %c0_i32 : i32, i32
  }
  func.func @transform_2(%arg0: i32, %arg1: memref<16xi32, #tpu.memory_space<smem>>, %arg2: memref<16xi32, #tpu.memory_space<smem>>) -> (i32, i32) {
    %c0_i32 = arith.constant 0 : i32
    %c0_i32_0 = arith.constant 0 : i32
    %c0_i32_1 = arith.constant 0 : i32
    return %c0_i32, %c0_i32_0 : i32, i32
  }
  func.func @transform_3(%arg0: i32, %arg1: memref<16xi32, #tpu.memory_space<smem>>, %arg2: memref<16xi32, #tpu.memory_space<smem>>) -> (i32, i32) {
    %c0_i32 = arith.constant 0 : i32
    %c0_i32_0 = arith.constant 0 : i32
    %c0_i32_1 = arith.constant 0 : i32
    return %c0_i32, %c0_i32_0 : i32, i32
  }
  func.func @transform_4(%arg0: i32, %arg1: memref<16xi32, #tpu.memory_space<smem>>, %arg2: memref<16xi32, #tpu.memory_space<smem>>) -> (i32, i32) {
    %c0_i32 = arith.constant 0 : i32
    %c0_i32_0 = arith.constant 0 : i32
    %c0_i32_1 = arith.constant 0 : i32
    return %c0_i32, %c0_i32_0 : i32, i32
  }
  func.func @transform_5(%arg0: i32, %arg1: memref<16xi32, #tpu.memory_space<smem>>, %arg2: memref<16xi32, #tpu.memory_space<smem>>) -> (i32, i32) {
    %c0_i32 = arith.constant 0 : i32
    %c0_i32_0 = arith.constant 0 : i32
    %c0_i32_1 = arith.constant 0 : i32
    return %c0_i32, %c0_i32_0 : i32, i32
  }
  func.func @transform_6(%arg0: i32, %arg1: memref<16xi32, #tpu.memory_space<smem>>, %arg2: memref<16xi32, #tpu.memory_space<smem>>) -> (i32, i32) {
    %c0_i32 = arith.constant 0 : i32
    %c0_i32_0 = arith.constant 0 : i32
    %c0_i32_1 = arith.constant 0 : i32
    return %c0_i32, %c0_i32_0 : i32, i32
  }
  func.func @transform_7(%arg0: i32, %arg1: memref<16xi32, #tpu.memory_space<smem>>, %arg2: memref<16xi32, #tpu.memory_space<smem>>) -> (i32, i32) {
    %c0_i32 = arith.constant 0 : i32
    %c0_i32_0 = arith.constant 0 : i32
    %c0_i32_1 = arith.constant 0 : i32
    return %c0_i32, %c0_i32_0 : i32, i32
  }
  func.func @transform_8(%arg0: i32, %arg1: memref<16xi32, #tpu.memory_space<smem>>, %arg2: memref<16xi32, #tpu.memory_space<smem>>) -> (i32, i32) {
    %c0_i32 = arith.constant 0 : i32
    %c0_i32_0 = arith.constant 0 : i32
    %c0_i32_1 = arith.constant 0 : i32
    return %c0_i32, %c0_i32_0 : i32, i32
  }
  func.func @transform_9(%arg0: i32, %arg1: memref<16xi32, #tpu.memory_space<smem>>, %arg2: memref<16xi32, #tpu.memory_space<smem>>) -> (i32, i32) {
    %c0_i32 = arith.constant 0 : i32
    %c0_i32_0 = arith.constant 0 : i32
    %c0_i32_1 = arith.constant 0 : i32
    return %c0_i32, %c0_i32_0 : i32, i32
  }
  func.func @transform_10(%arg0: i32, %arg1: memref<16xi32, #tpu.memory_space<smem>>, %arg2: memref<16xi32, #tpu.memory_space<smem>>) -> (i32, i32, i32) {
    %c0_i32 = arith.constant 0 : i32
    %c0_i32_0 = arith.constant 0 : i32
    %c0_i32_1 = arith.constant 0 : i32
    %c0_i32_2 = arith.constant 0 : i32
    return %c0_i32, %c0_i32_0, %c0_i32_1 : i32, i32, i32
  }
  func.func @transform_11(%arg0: i32, %arg1: memref<16xi32, #tpu.memory_space<smem>>, %arg2: memref<16xi32, #tpu.memory_space<smem>>) -> (i32, i32) {
    %c0_i32 = arith.constant 0 : i32
    %c0_i32_0 = arith.constant 0 : i32
    %c0_i32_1 = arith.constant 0 : i32
    return %c0_i32, %c0_i32_0 : i32, i32
  }
  func.func @transform_12(%arg0: i32, %arg1: memref<16xi32, #tpu.memory_space<smem>>, %arg2: memref<16xi32, #tpu.memory_space<smem>>) -> (i32, i32) {
    %c0_i32 = arith.constant 0 : i32
    %c0_i32_0 = arith.constant 0 : i32
    return %arg0, %c0_i32 : i32, i32
  }
  func.func @transform_13(%arg0: i32, %arg1: memref<16xi32, #tpu.memory_space<smem>>, %arg2: memref<16xi32, #tpu.memory_space<smem>>) -> (i32, i32) {
    %c0_i32 = arith.constant 0 : i32
    %c0_i32_0 = arith.constant 0 : i32
    return %arg0, %c0_i32 : i32, i32
  }
}

</mosaic_0001>

<llo_original>
// kernel: tpu_custom_call.1
$region0: #{tpu_custom_call.1}
  #allocation0 [shape = 'u32[]', space=smem, size = 0x4, offset = 0x4, fixed_abs, tag = 'smem constant byte address 0x4 - core index']
  #allocation1 [shape = 'u32[144,128]{1,0:T(1,128)}', space=vmem, size = 0x12000, scoped, tag = 'internal scratch']
  #allocation2 [shape = 'f32[8,128]{1,0:T(8,128)}', space=vmem, size = 0x1000, scoped, tag = 'scratch operand']
  #allocation3 [shape = 'f32[8,128]{1,0:T(8,128)}', space=vmem, size = 0x1000, scoped, tag = 'scratch operand']
  #allocation4 [shape = 's32[1]{0}', space=sflag, size = 0x4, scoped, tag = 'scoped memory for tpu_custom_call.1']
  #allocation5 [shape = 'u8[512]{0}', space=smem, size = 0x200, scoped, tag = 'prefetched SMEM operand 0']
  #allocation6 [shape = 'u8[512]{0}', space=smem, size = 0x200, scoped, tag = 'prefetched SMEM operand 1']
  %s0 = inlined_call_operand.hbm [shape: s32[16], index: 0, kind: input, shape index: {}]
  %s1 = inlined_call_operand.vmem [shape: s32[16], index: 1, kind: input, shape index: {}]
  %s2 = inlined_call_operand.hbm [shape: f32[8,128], index: 2, kind: input, shape index: {}]
  %s3 = inlined_call_operand.hbm [shape: f32[16,128], index: 3, kind: input, shape index: {}]
  %s4 = inlined_call_operand.hbm [shape: f32[128,128], index: 4, kind: input, shape index: {}]
  %s5 = inlined_call_operand.hbm [shape: f32[128,128], index: 5, kind: input, shape index: {}]
  %s6 = inlined_call_operand.hbm [shape: f32[128,128], index: 6, kind: input, shape index: {}]
  %s7 = inlined_call_operand.vmem [shape: f32[1,128], index: 7, kind: input, shape index: {}]
  %s8 = inlined_call_operand.hbm [shape: f32[128,512], index: 8, kind: input, shape index: {}]
  %s9 = inlined_call_operand.vmem [shape: f32[1,512], index: 9, kind: input, shape index: {}]
  %s10 = inlined_call_operand.hbm [shape: f32[128,128], index: 10, kind: input, shape index: {}]
  %s11 = inlined_call_operand.vmem [shape: f32[1,128], index: 11, kind: input, shape index: {}]
  %s12 = inlined_call_operand.hbm [shape: f32[4,128,128], index: 12, kind: input, shape index: {}]
  %s13 = inlined_call_operand.vmem [shape: f32[1,128], index: 13, kind: input, shape index: {}]
  %s14 = inlined_call_operand.hbm [shape: f32[16,512], index: 14, kind: output, shape index: {0}]
  %s15 = inlined_call_operand.hbm [shape: f32[16,128], index: 15, kind: output, shape index: {1}]
  %16 = xla_tuple %s14, %s15
  %s17 = sld [smem:[#allocation0]]
  $region121: #{tpu_custom_call.1} parent=0
    _
  %s19 = ssub.s32 1, %s17
  %s20 = scalar_select 0, %s19, %s17
  %22 = dma.hbm_to_smem %s0, 16, [#allocation5], [#allocation4]
  %s23 = sshll.u32 %s1, 4
  %s24 = int_to_ptr.vmem [resolvable:$true] %s23
  %26 = dma.vmem_to_smem %s24, 16, [#allocation6], [#allocation4]
  %27 = dma.done [#allocation4], 32
  %28 = sfence
  $region1: #{tpu_custom_call.1} parent=0
    #allocation7 [shape = 'u8[4096]{0}', space=vmem, size = 0x1000, scoped, tag = 'input window, operand 2, single buffered']
    #allocation8 [shape = 's32[2]{0}', space=sflag, size = 0x8, scoped, tag = 'scoped memory for tpu_custom_call.1']
    #allocation9 [shape = 's32[2]{0}', space=sflag, size = 0x8, scoped, tag = 'scoped memory for tpu_custom_call.1']
    #allocation10 [shape = 'u8[8192]{0}', space=vmem, size = 0x2000, scoped, tag = 'input window, operand 3']
    #allocation11 [shape = 's32[2]{0}', space=sflag, size = 0x8, scoped, tag = 'scoped memory for tpu_custom_call.1']
    #allocation12 [shape = 'u8[65536]{0}', space=vmem, size = 0x10000, scoped, tag = 'input window, operand 4, single buffered']
    #allocation13 [shape = 'u8[65536]{0}', space=vmem, size = 0x10000, scoped, tag = 'input window, operand 5, single buffered']
    #allocation14 [shape = 's32[1]{0}', space=sflag, size = 0x4, scoped, tag = 'scoped memory for tpu_custom_call.1']
    #allocation15 [shape = 'u8[65536]{0}', space=vmem, size = 0x10000, scoped, tag = 'input window, operand 6, single buffered']
    #allocation16 [shape = 'u8[262144]{0}', space=vmem, size = 0x40000, scoped, tag = 'input window, operand 8, single buffered']
    #allocation17 [shape = 's32[1]{0}', space=sflag, size = 0x4, scoped, tag = 'scoped memory for tpu_custom_call.1']
    #allocation18 [shape = 'u8[65536]{0}', space=vmem, size = 0x10000, scoped, tag = 'input window, operand 10, single buffered']
    #allocation19 [shape = 'u8[262144]{0}', space=vmem, size = 0x40000, scoped, tag = 'input window, operand 12, single buffered']
    #allocation20 [shape = 's32[1]{0}', space=sflag, size = 0x4, scoped, tag = 'scoped memory for tpu_custom_call.1']
    #allocation21 [shape = 'u8[32768]{0}', space=vmem, size = 0x8000, scoped, tag = 'output window, operand 0']
    #allocation22 [shape = 'u8[8192]{0}', space=vmem, size = 0x2000, scoped, tag = 'output window, operand 1']
    #allocation23 [shape = 's32[2]{0}', space=sflag, size = 0x8, scoped, tag = 'scoped memory for tpu_custom_call.1']
    %29 = vsyncpa [#allocation8], 0
    %30 = vsyncpa [#allocation11], 0
    %s31 = scalar_lea.sflag [#allocation11], 1
    %32 = vsyncpa %s31, 0
    %33 = vsyncpa [#allocation14], 0
    %34 = vsyncpa [#allocation17], 0
    %35 = vsyncpa [#allocation20], 0
    %36 = vsyncpa [#allocation9], 0
    %s37 = scalar_lea.sflag [#allocation9], 1
    %38 = vsyncpa %s37, 0
    %39 = vsyncpa [#allocation23], 0
    %s40 = scalar_lea.sflag [#allocation23], 1
    %41 = vsyncpa %s40, 0
    loop: start=0, step=1, limit=4
    $region2: #{tpu_custom_call.1} parent=1 // loop_pre_header
      _
    $region3: #{tpu_custom_call.1} parent=1 // loop_header
      %s43 = sphi 0, %s47
      %p44 = scmp.ge.s32.totalorder %s43, 4
      %s51 = sphi 0, %s51
      %s53 = sphi 0, %s51
      %s54 = sphi 0, %s53
      %s68 = sphi 0, %s54
      %s74 = sphi 0, %s76
      %s77 = sphi 0, %s74
      %s78 = sphi 0, %s77
      %s94 = sphi 0, %s78
      %s98 = sphi 0, %s98
      %s100 = sphi 0, %s98
      %s101 = sphi 0, %s100
      %s115 = sphi 0, %s101
      %s119 = sphi 0, %s119
      %s121 = sphi 0, %s119
      %s122 = sphi 0, %s121
      %s136 = sphi 0, %s122
      %s140 = sphi 0, %s140
      %s142 = sphi 0, %s140
      %s143 = sphi 0, %s142
      %s157 = sphi 0, %s143
      %s161 = sphi 0, %s161
      %s163 = sphi 0, %s161
      %s164 = sphi 0, %s163
      %s178 = sphi 0, %s164
      %s182 = sphi 0, %s182
      %s184 = sphi 0, %s182
      %s185 = sphi 0, %s184
      %s199 = sphi 0, %s185
      %s203 = sphi 0, %s203
      %s205 = sphi 0, %s203
      %s206 = sphi 0, %s205
      %s220 = sphi 0, %s206
      %s224 = sphi 0, %s224
      %s226 = sphi 0, %s224
      %s227 = sphi 0, %s226
      %s241 = sphi 0, %s227
      %s245 = sphi 0, %s245
      %s247 = sphi 0, %s245
      %s248 = sphi 0, %s247
      %s262 = sphi 0, %s248
      %s266 = sphi 0, %s266
      %s268 = sphi 0, %s266
      %s269 = sphi 0, %s268
      %s283 = sphi 0, %s269
      %s287 = sphi 0, %s287
      %s289 = sphi 0, %s287
      %s290 = sphi 0, %s289
      %s304 = sphi 0, %s290
      %s310 = sphi 0, %s312
      %s313 = sphi 0, %s310
      %s314 = sphi 0, %s313
      %s330 = sphi 0, %s314
      %s336 = sphi 0, %s338
      %s339 = sphi 0, %s336
      %s340 = sphi 0, %s339
      %s356 = sphi 0, %s340
    $region4: #{tpu_custom_call.1} parent=1 // loop_header_branch
      %46 = sbr.rel (%p44) target = $region8
    $region5: #{tpu_custom_call.1} parent=1 // loop_body
      %s48 = ssub.s32 %s43, 1
      %s49 = ssub.s32 %s43, 2
      %s50 = sadd.s32 %s43, 1
      %s52 = sadd.s32 %s51, 1
      %p55 = scmp.eq.s32.totalorder %s43, 1
      %p56 = scmp.ne.s32.totalorder %s51, %s53
      %p57 = scmp.eq.s32.totalorder %s43, 0
      %p58 = por %p56, %p57
      %p59 = scmp.ne.s32.totalorder %s51, %s53
      %p60 = scmp.eq.s32.totalorder %s48, 1
      %p61 = por %p59, %p60
      %p62 = scmp.ne.s32.totalorder %s53, %s54
      %p63 = scmp.eq.s32.totalorder %s48, 0
      %p64 = por %p62, %p63
      %p65 = scmp.ne.s32.totalorder %s53, %s54
      %p66 = scmp.eq.s32.totalorder %s49, 1
      %p67 = por %p65, %p66
      %p69 = scmp.ne.s32.totalorder %s54, %s68
      %p70 = scmp.eq.s32.totalorder %s49, 0
      %p71 = por %p69, %p70
      %s72 = ssub.s32 %s43, %s50
      %p73 = scmp.eq.s32.totalorder %s72, 0
      %s75 = sadd.s32 %s74, 1
      %s76 = scalar_select %p73, %s74, %s75
      %p79 = pneg %p73
      %p80 = scmp.eq.s32.totalorder %s43, 1
      %p81 = por %p79, %p80
      %p82 = scmp.ne.s32.totalorder %s74, %s77
      %p83 = scmp.eq.s32.totalorder %s43, 0
      %p84 = por %p82, %p83
      %p85 = scmp.ne.s32.totalorder %s74, %s77
      %p86 = scmp.eq.s32.totalorder %s48, 1
      %p87 = por %p85, %p86
      %p88 = scmp.ne.s32.totalorder %s77, %s78
      %p89 = scmp.eq.s32.totalorder %s48, 0
      %p90 = por %p88, %p89
      %p91 = scmp.ne.s32.totalorder %s77, %s78
      %p92 = scmp.eq.s32.totalorder %s49, 1
      %p93 = por %p91, %p92
      %p95 = scmp.ne.s32.totalorder %s78, %s94
      %p96 = scmp.eq.s32.totalorder %s49, 0
      %p97 = por %p95, %p96
      %s99 = sadd.s32 %s98, 1
      %p102 = scmp.eq.s32.totalorder %s43, 1
      %p103 = scmp.ne.s32.totalorder %s98, %s100
      %p104 = scmp.eq.s32.totalorder %s43, 0
      %p105 = por %p103, %p104
      %p106 = scmp.ne.s32.totalorder %s98, %s100
      %p107 = scmp.eq.s32.totalorder %s48, 1
      %p108 = por %p106, %p107
      %p109 = scmp.ne.s32.totalorder %s100, %s101
      %p110 = scmp.eq.s32.totalorder %s48, 0
      %p111 = por %p109, %p110
      %p112 = scmp.ne.s32.totalorder %s100, %s101
      %p113 = scmp.eq.s32.totalorder %s49, 1
      %p114 = por %p112, %p113
      %p116 = scmp.ne.s32.totalorder %s101, %s115
      %p117 = scmp.eq.s32.totalorder %s49, 0
      %p118 = por %p116, %p117
      %s120 = sadd.s32 %s119, 1
      %p123 = scmp.eq.s32.totalorder %s43, 1
      %p124 = scmp.ne.s32.totalorder %s119, %s121
      %p125 = scmp.eq.s32.totalorder %s43, 0
      %p126 = por %p124, %p125
      %p127 = scmp.ne.s32.totalorder %s119, %s121
      %p128 = scmp.eq.s32.totalorder %s48, 1
      %p129 = por %p127, %p128
      %p130 = scmp.ne.s32.totalorder %s121, %s122
      %p131 = scmp.eq.s32.totalorder %s48, 0
      %p132 = por %p130, %p131
      %p133 = scmp.ne.s32.totalorder %s121, %s122
      %p134 = scmp.eq.s32.totalorder %s49, 1
      %p135 = por %p133, %p134
      %p137 = scmp.ne.s32.totalorder %s122, %s136
      %p138 = scmp.eq.s32.totalorder %s49, 0
      %p139 = por %p137, %p138
      %s141 = sadd.s32 %s140, 1
      %p144 = scmp.eq.s32.totalorder %s43, 1
      %p145 = scmp.ne.s32.totalorder %s140, %s142
      %p146 = scmp.eq.s32.totalorder %s43, 0
      %p147 = por %p145, %p146
      %p148 = scmp.ne.s32.totalorder %s140, %s142
      %p149 = scmp.eq.s32.totalorder %s48, 1
      %p150 = por %p148, %p149
      %p151 = scmp.ne.s32.totalorder %s142, %s143
      %p152 = scmp.eq.s32.totalorder %s48, 0
      %p153 = por %p151, %p152
      %p154 = scmp.ne.s32.totalorder %s142, %s143
      %p155 = scmp.eq.s32.totalorder %s49, 1
      %p156 = por %p154, %p155
      %p158 = scmp.ne.s32.totalorder %s143, %s157
      %p159 = scmp.eq.s32.totalorder %s49, 0
      %p160 = por %p158, %p159
      %s162 = sadd.s32 %s161, 1
      %p165 = scmp.eq.s32.totalorder %s43, 1
      %p166 = scmp.ne.s32.totalorder %s161, %s163
      %p167 = scmp.eq.s32.totalorder %s43, 0
      %p168 = por %p166, %p167
      %p169 = scmp.ne.s32.totalorder %s161, %s163
      %p170 = scmp.eq.s32.totalorder %s48, 1
      %p171 = por %p169, %p170
      %p172 = scmp.ne.s32.totalorder %s163, %s164
      %p173 = scmp.eq.s32.totalorder %s48, 0
      %p174 = por %p172, %p173
      %p175 = scmp.ne.s32.totalorder %s163, %s164
      %p176 = scmp.eq.s32.totalorder %s49, 1
      %p177 = por %p175, %p176
      %p179 = scmp.ne.s32.totalorder %s164, %s178
      %p180 = scmp.eq.s32.totalorder %s49, 0
      %p181 = por %p179, %p180
      %s183 = sadd.s32 %s182, 1
      %p186 = scmp.eq.s32.totalorder %s43, 1
      %p187 = scmp.ne.s32.totalorder %s182, %s184
      %p188 = scmp.eq.s32.totalorder %s43, 0
      %p189 = por %p187, %p188
      %p190 = scmp.ne.s32.totalorder %s182, %s184
      %p191 = scmp.eq.s32.totalorder %s48, 1
      %p192 = por %p190, %p191
      %p193 = scmp.ne.s32.totalorder %s184, %s185
      %p194 = scmp.eq.s32.totalorder %s48, 0
      %p195 = por %p193, %p194
      %p196 = scmp.ne.s32.totalorder %s184, %s185
      %p197 = scmp.eq.s32.totalorder %s49, 1
      %p198 = por %p196, %p197
      %p200 = scmp.ne.s32.totalorder %s185, %s199
      %p201 = scmp.eq.s32.totalorder %s49, 0
      %p202 = por %p200, %p201
      %s204 = sadd.s32 %s203, 1
      %p207 = scmp.eq.s32.totalorder %s43, 1
      %p208 = scmp.ne.s32.totalorder %s203, %s205
      %p209 = scmp.eq.s32.totalorder %s43, 0
      %p210 = por %p208, %p209
      %p211 = scmp.ne.s32.totalorder %s203, %s205
      %p212 = scmp.eq.s32.totalorder %s48, 1
      %p213 = por %p211, %p212
      %p214 = scmp.ne.s32.totalorder %s205, %s206
      %p215 = scmp.eq.s32.totalorder %s48, 0
      %p216 = por %p214, %p215
      %p217 = scmp.ne.s32.totalorder %s205, %s206
      %p218 = scmp.eq.s32.totalorder %s49, 1
      %p219 = por %p217, %p218
      %p221 = scmp.ne.s32.totalorder %s206, %s220
      %p222 = scmp.eq.s32.totalorder %s49, 0
      %p223 = por %p221, %p222
      %s225 = sadd.s32 %s224, 1
      %p228 = scmp.eq.s32.totalorder %s43, 1
      %p229 = scmp.ne.s32.totalorder %s224, %s226
      %p230 = scmp.eq.s32.totalorder %s43, 0
      %p231 = por %p229, %p230
      %p232 = scmp.ne.s32.totalorder %s224, %s226
      %p233 = scmp.eq.s32.totalorder %s48, 1
      %p234 = por %p232, %p233
      %p235 = scmp.ne.s32.totalorder %s226, %s227
      %p236 = scmp.eq.s32.totalorder %s48, 0
      %p237 = por %p235, %p236
      %p238 = scmp.ne.s32.totalorder %s226, %s227
      %p239 = scmp.eq.s32.totalorder %s49, 1
      %p240 = por %p238, %p239
      %p242 = scmp.ne.s32.totalorder %s227, %s241
      %p243 = scmp.eq.s32.totalorder %s49, 0
      %p244 = por %p242, %p243
      %s246 = sadd.s32 %s245, 1
      %p249 = scmp.eq.s32.totalorder %s43, 1
      %p250 = scmp.ne.s32.totalorder %s245, %s247
      %p251 = scmp.eq.s32.totalorder %s43, 0
      %p252 = por %p250, %p251
      %p253 = scmp.ne.s32.totalorder %s245, %s247
      %p254 = scmp.eq.s32.totalorder %s48, 1
      %p255 = por %p253, %p254
      %p256 = scmp.ne.s32.totalorder %s247, %s248
      %p257 = scmp.eq.s32.totalorder %s48, 0
      %p258 = por %p256, %p257
      %p259 = scmp.ne.s32.totalorder %s247, %s248
      %p260 = scmp.eq.s32.totalorder %s49, 1
      %p261 = por %p259, %p260
      %p263 = scmp.ne.s32.totalorder %s248, %s262
      %p264 = scmp.eq.s32.totalorder %s49, 0
      %p265 = por %p263, %p264
      %s267 = sadd.s32 %s266, 1
      %p270 = scmp.eq.s32.totalorder %s43, 1
      %p271 = scmp.ne.s32.totalorder %s266, %s268
      %p272 = scmp.eq.s32.totalorder %s43, 0
      %p273 = por %p271, %p272
      %p274 = scmp.ne.s32.totalorder %s266, %s268
      %p275 = scmp.eq.s32.totalorder %s48, 1
      %p276 = por %p274, %p275
      %p277 = scmp.ne.s32.totalorder %s268, %s269
      %p278 = scmp.eq.s32.totalorder %s48, 0
      %p279 = por %p277, %p278
      %p280 = scmp.ne.s32.totalorder %s268, %s269
      %p281 = scmp.eq.s32.totalorder %s49, 1
      %p282 = por %p280, %p281
      %p284 = scmp.ne.s32.totalorder %s269, %s283
      %p285 = scmp.eq.s32.totalorder %s49, 0
      %p286 = por %p284, %p285
      %s288 = sadd.s32 %s287, 1
      %p291 = scmp.eq.s32.totalorder %s43, 1
      %p292 = scmp.ne.s32.totalorder %s287, %s289
      %p293 = scmp.eq.s32.totalorder %s43, 0
      %p294 = por %p292, %p293
      %p295 = scmp.ne.s32.totalorder %s287, %s289
      %p296 = scmp.eq.s32.totalorder %s48, 1
      %p297 = por %p295, %p296
      %p298 = scmp.ne.s32.totalorder %s289, %s290
      %p299 = scmp.eq.s32.totalorder %s48, 0
      %p300 = por %p298, %p299
      %p301 = scmp.ne.s32.totalorder %s289, %s290
      %p302 = scmp.eq.s32.totalorder %s49, 1
      %p303 = por %p301, %p302
      %p305 = scmp.ne.s32.totalorder %s290, %s304
      %p306 = scmp.eq.s32.totalorder %s49, 0
      %p307 = por %p305, %p306
      %s308 = ssub.s32 %s43, %s50
      %p309 = scmp.eq.s32.totalorder %s308, 0
      %s311 = sadd.s32 %s310, 1
      %s312 = scalar_select %p309, %s310, %s311
      %p315 = pneg %p309
      %p316 = scmp.eq.s32.totalorder %s43, 1
      %p317 = por %p315, %p316
      %p318 = scmp.ne.s32.totalorder %s310, %s313
      %p319 = scmp.eq.s32.totalorder %s43, 0
      %p320 = por %p318, %p319
      %p321 = scmp.ne.s32.totalorder %s310, %s313
      %p322 = scmp.eq.s32.totalorder %s48, 1
      %p323 = por %p321, %p322
      %p324 = scmp.ne.s32.totalorder %s313, %s314
      %p325 = scmp.eq.s32.totalorder %s48, 0
      %p326 = por %p324, %p325
      %p327 = scmp.ne.s32.totalorder %s313, %s314
      %p328 = scmp.eq.s32.totalorder %s49, 1
      %p329 = por %p327, %p328
      %p331 = scmp.ne.s32.totalorder %s314, %s330
      %p332 = scmp.eq.s32.totalorder %s49, 0
      %p333 = por %p331, %p332
      %s334 = ssub.s32 %s43, %s50
      %p335 = scmp.eq.s32.totalorder %s334, 0
      %s337 = sadd.s32 %s336, 1
      %s338 = scalar_select %p335, %s336, %s337
      %p341 = pneg %p335
      %p342 = scmp.eq.s32.totalorder %s43, 1
      %p343 = por %p341, %p342
      %p344 = scmp.ne.s32.totalorder %s336, %s339
      %p345 = scmp.eq.s32.totalorder %s43, 0
      %p346 = por %p344, %p345
      %p347 = scmp.ne.s32.totalorder %s336, %s339
      %p348 = scmp.eq.s32.totalorder %s48, 1
      %p349 = por %p347, %p348
      %p350 = scmp.ne.s32.totalorder %s339, %s340
      %p351 = scmp.eq.s32.totalorder %s48, 0
      %p352 = por %p350, %p351
      %p353 = scmp.ne.s32.totalorder %s339, %s340
      %p354 = scmp.eq.s32.totalorder %s49, 1
      %p355 = por %p353, %p354
      %p357 = scmp.ne.s32.totalorder %s340, %s356
      %p358 = scmp.eq.s32.totalorder %s49, 0
      %p359 = por %p357, %p358
      %p360 = scmp.le.s32.totalorder 1, %s43
      %p361 = scmp.lt.s32.totalorder %s43, 3
      %p362 = pnand %p360, %p361
      %p363 = pneg %p362
      // Predicated region
      $region9: #{tpu_custom_call.1} parent=5 // pred_check
        _
      $region10: #{tpu_custom_call.1} parent=5 // pred_check_branch
        %365 = sbr.rel (%p362) target = $region12
      $region11: #{tpu_custom_call.1} parent=5 // pred_region
        %s366 = ssub.s32 %s43, 1
        // Predicated region
        $region13: #{tpu_custom_call.1} parent=11 // pred_check
          %p367 = pneg %p64
        $region14: #{tpu_custom_call.1} parent=11 // pred_check_branch
          %369 = sbr.rel (%p367) target = $region16
        $region15: #{tpu_custom_call.1} parent=11 // pred_region
          %s371 = ssub.s32 128, 128
          %372 = vsyncadd [#allocation8], %s371
          %s374 = sshll.u32 [#allocation7], 4
          %s375 = int_to_ptr.vmem [resolvable:$true] %s374
          %377 = dma.hbm_to_vmem [thread:$0]  %s2, 128, %s375, [#allocation8]
        $region16: #{tpu_custom_call.1} parent=11 // pred_fallthru
          _
        // Predicated region
        $region17: #{tpu_custom_call.1} parent=11 // pred_check
          %p378 = pneg %p111
        $region18: #{tpu_custom_call.1} parent=11 // pred_check_branch
          %380 = sbr.rel (%p378) target = $region20
        $region19: #{tpu_custom_call.1} parent=11 // pred_region
          %s382 = ssub.s32 2048, 2048
          %383 = vsyncadd [#allocation11], %s382
          %s384 = sshll.u32 [#allocation12], 4
          %s385 = int_to_ptr.vmem [resolvable:$true] %s384
          %390 = dma.hbm_to_vmem [thread:$0]  %s4, 2048, %s385, [#allocation11], 128, 128, 8
        $region20: #{tpu_custom_call.1} parent=11 // pred_fallthru
          _
        // Predicated region
        $region21: #{tpu_custom_call.1} parent=11 // pred_check
          %p391 = pneg %p132
        $region22: #{tpu_custom_call.1} parent=11 // pred_check_branch
          %393 = sbr.rel (%p391) target = $region24
        $region23: #{tpu_custom_call.1} parent=11 // pred_region
          %s395 = ssub.s32 2048, 2048
          %396 = vsyncadd [#allocation14], %s395
          %s397 = sshll.u32 [#allocation13], 4
          %s398 = int_to_ptr.vmem [resolvable:$true] %s397
          %403 = dma.hbm_to_vmem [thread:$0]  %s5, 2048, %s398, [#allocation14], 128, 128, 8
        $region24: #{tpu_custom_call.1} parent=11 // pred_fallthru
          _
        // Predicated region
        $region25: #{tpu_custom_call.1} parent=11 // pred_check
          %p404 = pneg %p153
        $region26: #{tpu_custom_call.1} parent=11 // pred_check_branch
          %406 = sbr.rel (%p404) target = $region28
        $region27: #{tpu_custom_call.1} parent=11 // pred_region
          %s408 = ssub.s32 2048, 2048
          %409 = vsyncadd [#allocation14], %s408
          %s410 = sshll.u32 [#allocation15], 4
          %s411 = int_to_ptr.vmem [resolvable:$true] %s410
          %416 = dma.hbm_to_vmem [thread:$0]  %s6, 2048, %s411, [#allocation14], 128, 128, 8
        $region28: #{tpu_custom_call.1} parent=11 // pred_fallthru
          _
        // Predicated region
        $region29: #{tpu_custom_call.1} parent=11 // pred_check
          %p417 = pneg %p174
        $region30: #{tpu_custom_call.1} parent=11 // pred_check_branch
          %419 = sbr.rel (%p417) target = $region32
        $region31: #{tpu_custom_call.1} parent=11 // pred_region
          _
        $region32: #{tpu_custom_call.1} parent=11 // pred_fallthru
          _
        // Predicated region
        $region33: #{tpu_custom_call.1} parent=11 // pred_check
          %p420 = pneg %p195
        $region34: #{tpu_custom_call.1} parent=11 // pred_check_branch
          %422 = sbr.rel (%p420) target = $region36
        $region35: #{tpu_custom_call.1} parent=11 // pred_region
          %s424 = ssub.s32 8192, 8192
          %425 = vsyncadd [#allocation17], %s424
          %s426 = sshll.u32 [#allocation16], 4
          %s427 = int_to_ptr.vmem [resolvable:$true] %s426
          %432 = dma.hbm_to_vmem [thread:$0]  %s8, 8192, %s427, [#allocation17], 512, 512, 32
        $region36: #{tpu_custom_call.1} parent=11 // pred_fallthru
          _
        // Predicated region
        $region37: #{tpu_custom_call.1} parent=11 // pred_check
          %p433 = pneg %p216
        $region38: #{tpu_custom_call.1} parent=11 // pred_check_branch
          %435 = sbr.rel (%p433) target = $region40
        $region39: #{tpu_custom_call.1} parent=11 // pred_region
          _
        $region40: #{tpu_custom_call.1} parent=11 // pred_fallthru
          _
        // Predicated region
        $region41: #{tpu_custom_call.1} parent=11 // pred_check
          %p436 = pneg %p237
        $region42: #{tpu_custom_call.1} parent=11 // pred_check_branch
          %438 = sbr.rel (%p436) target = $region44
        $region43: #{tpu_custom_call.1} parent=11 // pred_region
          %s440 = ssub.s32 2048, 2048
          %441 = vsyncadd [#allocation17], %s440
          %s442 = sshll.u32 [#allocation18], 4
          %s443 = int_to_ptr.vmem [resolvable:$true] %s442
          %448 = dma.hbm_to_vmem [thread:$0]  %s10, 2048, %s443, [#allocation17], 128, 128, 8
        $region44: #{tpu_custom_call.1} parent=11 // pred_fallthru
          _
        // Predicated region
        $region45: #{tpu_custom_call.1} parent=11 // pred_check
          %p449 = pneg %p258
        $region46: #{tpu_custom_call.1} parent=11 // pred_check_branch
          %451 = sbr.rel (%p449) target = $region48
        $region47: #{tpu_custom_call.1} parent=11 // pred_region
          _
        $region48: #{tpu_custom_call.1} parent=11 // pred_fallthru
          _
        // Predicated region
        $region49: #{tpu_custom_call.1} parent=11 // pred_check
          %p452 = pneg %p279
        $region50: #{tpu_custom_call.1} parent=11 // pred_check_branch
          %454 = sbr.rel (%p452) target = $region52
        $region51: #{tpu_custom_call.1} parent=11 // pred_region
          %s456 = ssub.s32 8192, 8192
          %457 = vsyncadd [#allocation20], %s456
          %s458 = sshll.u32 [#allocation19], 4
          %s459 = int_to_ptr.vmem [resolvable:$true] %s458
          %464 = dma.hbm_to_vmem [thread:$0]  %s12, 8192, %s459, [#allocation20], 128, 128, 8
        $region52: #{tpu_custom_call.1} parent=11 // pred_fallthru
          _
        // Predicated region
        $region53: #{tpu_custom_call.1} parent=11 // pred_check
          %p465 = pneg %p300
        $region54: #{tpu_custom_call.1} parent=11 // pred_check_branch
          %467 = sbr.rel (%p465) target = $region56
        $region55: #{tpu_custom_call.1} parent=11 // pred_region
          _
        $region56: #{tpu_custom_call.1} parent=11 // pred_fallthru
          _
      $region12: #{tpu_custom_call.1} parent=5 // pred_fallthru
        _
      %p468 = scmp.lt.s32.totalorder %s43, 2
      // Predicated region
      $region57: #{tpu_custom_call.1} parent=5 // pred_check
        %p469 = pneg %p468
      $region58: #{tpu_custom_call.1} parent=5 // pred_check_branch
        %471 = sbr.rel (%p469) target = $region60
      $region59: #{tpu_custom_call.1} parent=5 // pred_region
        // Predicated region
        $region61: #{tpu_custom_call.1} parent=59 // pred_check
          %p472 = pneg %p84
        $region62: #{tpu_custom_call.1} parent=59 // pred_check_branch
          %474 = sbr.rel (%p472) target = $region64
        $region63: #{tpu_custom_call.1} parent=59 // pred_region
          %s475 = sand.u32 %s43, 1
          %s476 = scalar_lea.sflag [#allocation11], %s475
          %s477 = sand.u32 %s74, 1
          %s478 = smul.addr %s477, 8
          %s479 = scalar_lea.vmem [#allocation10], %s478
          %s481 = ssub.s32 128, 128
          %482 = vsyncadd %s476, %s481
          %s483 = smul.addr %s43, 128
          %s484 = scalar_lea.hbm %s3, %s483
          %s486 = sshll.u32 %s479, 4
          %s487 = int_to_ptr.vmem [resolvable:$true] %s486
          %489 = dma.hbm_to_vmem [thread:$0]  %s484, 128, %s487, %s476
        $region64: #{tpu_custom_call.1} parent=59 // pred_fallthru
          _
      $region60: #{tpu_custom_call.1} parent=5 // pred_fallthru
        _
      %p490 = scmp.le.s32.totalorder 1, %s43
      %p491 = scmp.lt.s32.totalorder %s43, 3
      %p492 = pnand %p490, %p491
      %p493 = pneg %p492
      // Predicated region
      $region65: #{tpu_custom_call.1} parent=5 // pred_check
        _
      $region66: #{tpu_custom_call.1} parent=5 // pred_check_branch
        %495 = sbr.rel (%p492) target = $region68
      $region67: #{tpu_custom_call.1} parent=5 // pred_region
        %s496 = ssub.s32 %s43, 1
        // Predicated region
        $region69: #{tpu_custom_call.1} parent=67 // pred_check
          %p497 = pneg %p64
        $region70: #{tpu_custom_call.1} parent=67 // pred_check_branch
          %499 = sbr.rel (%p497) target = $region72
        $region71: #{tpu_custom_call.1} parent=67 // pred_region
          %500 = dma.done [#allocation8], 128
        $region72: #{tpu_custom_call.1} parent=67 // pred_fallthru
          _
        %s501 = sand.u32 %s48, 1
        %s502 = scalar_lea.sflag [#allocation11], %s501
        %s503 = sand.u32 %s77, 1
        %s504 = smul.addr %s503, 8
        %s505 = scalar_lea.vmem [#allocation10], %s504
        // Predicated region
        $region73: #{tpu_custom_call.1} parent=67 // pred_check
          %p506 = pneg %p90
        $region74: #{tpu_custom_call.1} parent=67 // pred_check_branch
          %508 = sbr.rel (%p506) target = $region76
        $region75: #{tpu_custom_call.1} parent=67 // pred_region
          %509 = dma.done %s502, 128
        $region76: #{tpu_custom_call.1} parent=67 // pred_fallthru
          _
        // Predicated region
        $region77: #{tpu_custom_call.1} parent=67 // pred_check
          %p510 = pneg %p111
        $region78: #{tpu_custom_call.1} parent=67 // pred_check_branch
          %512 = sbr.rel (%p510) target = $region80
        $region79: #{tpu_custom_call.1} parent=67 // pred_region
          %513 = dma.done [#allocation11], 2048
        $region80: #{tpu_custom_call.1} parent=67 // pred_fallthru
          _
        // Predicated region
        $region81: #{tpu_custom_call.1} parent=67 // pred_check
          %p514 = pneg %p132
        $region82: #{tpu_custom_call.1} parent=67 // pred_check_branch
          %516 = sbr.rel (%p514) target = $region84
        $region83: #{tpu_custom_call.1} parent=67 // pred_region
          %517 = dma.done [#allocation14], 2048
        $region84: #{tpu_custom_call.1} parent=67 // pred_fallthru
          _
        // Predicated region
        $region85: #{tpu_custom_call.1} parent=67 // pred_check
          %p518 = pneg %p153
        $region86: #{tpu_custom_call.1} parent=67 // pred_check_branch
          %520 = sbr.rel (%p518) target = $region88
        $region87: #{tpu_custom_call.1} parent=67 // pred_region
          %521 = dma.done [#allocation14], 2048
        $region88: #{tpu_custom_call.1} parent=67 // pred_fallthru
          _
        // Predicated region
        $region89: #{tpu_custom_call.1} parent=67 // pred_check
          %p522 = pneg %p195
        $region90: #{tpu_custom_call.1} parent=67 // pred_check_branch
          %524 = sbr.rel (%p522) target = $region92
        $region91: #{tpu_custom_call.1} parent=67 // pred_region
          %525 = dma.done [#allocation17], 8192
        $region92: #{tpu_custom_call.1} parent=67 // pred_fallthru
          _
        // Predicated region
        $region93: #{tpu_custom_call.1} parent=67 // pred_check
          %p526 = pneg %p237
        $region94: #{tpu_custom_call.1} parent=67 // pred_check_branch
          %528 = sbr.rel (%p526) target = $region96
        $region95: #{tpu_custom_call.1} parent=67 // pred_region
          %529 = dma.done [#allocation17], 2048
        $region96: #{tpu_custom_call.1} parent=67 // pred_fallthru
          _
        // Predicated region
        $region97: #{tpu_custom_call.1} parent=67 // pred_check
          %p530 = pneg %p279
        $region98: #{tpu_custom_call.1} parent=67 // pred_check_branch
          %532 = sbr.rel (%p530) target = $region100
        $region99: #{tpu_custom_call.1} parent=67 // pred_region
          %533 = dma.done [#allocation20], 8192
        $region100: #{tpu_custom_call.1} parent=67 // pred_fallthru
          _
        %p534 = pneg %p64
        %p535 = pneg %p61
        %s536 = sand.u32 %s48, 1
        %s537 = scalar_lea.sflag [#allocation11], %s536
        %s538 = sand.u32 %s77, 1
        %s539 = smul.addr %s538, 8
        %s540 = scalar_lea.vmem [#allocation10], %s539
        %p541 = pneg %p90
        %p542 = pneg %p87
        %p543 = pneg %p111
        %p544 = pneg %p108
        %p545 = pneg %p132
        %p546 = pneg %p129
        %p547 = pneg %p153
        %p548 = pneg %p150
        %p549 = pneg %p174
        %p550 = pneg %p171
        %p551 = pneg %p195
        %p552 = pneg %p192
        %p553 = pneg %p216
        %p554 = pneg %p213
        %p555 = pneg %p237
        %p556 = pneg %p234
        %p557 = pneg %p258
        %p558 = pneg %p255
        %p559 = pneg %p279
        %p560 = pneg %p276
        %p561 = pneg %p300
        %p562 = pneg %p297
        %p563 = pneg %p326
        %p564 = pneg %p323
        %s565 = sand.u32 %s313, 1
        %s566 = scalar_lea.sflag [#allocation9], %s565
        %s567 = sand.u32 %s313, 1
        %s568 = smul.addr %s567, 32
        %s569 = scalar_lea.vmem [#allocation21], %s568
        %p570 = pneg %p352
        %p571 = pneg %p349
        %s572 = sand.u32 %s339, 1
        %s573 = scalar_lea.sflag [#allocation23], %s572
        %s574 = sand.u32 %s339, 1
        %s575 = smul.addr %s574, 8
        %s576 = scalar_lea.vmem [#allocation22], %s575
        %s577 = smul.u32 %s48, 8
        %s578 = sld [smem:[#allocation5 + %s577]]
        %s579 = sld [smem:[#allocation6 + %s577]]
        %s580 = scalar_lea.vmem [#allocation7], %s578
        %v581 = vld [vmem:[%s580] sm:$0x1]
        %582 = vst [vmem:[#allocation2] sm:$0x1] %v581
        %s583 = scalar_lea.vmem [#allocation7], %s579
        %v584 = vld [vmem:[%s583] sm:$0x1]
        %585 = vst [vmem:[#allocation3] sm:$0x1] %v584
        %s586 = sadd.s32 %s577, 1
        %s587 = sld [smem:[#allocation5 + %s586]]
        %s588 = sld [smem:[#allocation6 + %s586]]
        %s589 = scalar_lea.vmem [#allocation7], %s587
        %v590 = vld [vmem:[%s589] sm:$0x1]
        %591 = vst [vmem:[#allocation2 + $0x1] sm:$0x1] %v590
        %s592 = scalar_lea.vmem [#allocation7], %s588
        %v593 = vld [vmem:[%s592] sm:$0x1]
        %594 = vst [vmem:[#allocation3 + $0x1] sm:$0x1] %v593
        %s595 = sadd.s32 %s577, 2
        %s596 = sld [smem:[#allocation5 + %s595]]
        %s597 = sld [smem:[#allocation6 + %s595]]
        %s598 = scalar_lea.vmem [#allocation7], %s596
        %v599 = vld [vmem:[%s598] sm:$0x1]
        %600 = vst [vmem:[#allocation2 + $0x2] sm:$0x1] %v599
        %s601 = scalar_lea.vmem [#allocation7], %s597
        %v602 = vld [vmem:[%s601] sm:$0x1]
        %603 = vst [vmem:[#allocation3 + $0x2] sm:$0x1] %v602
        %s604 = sadd.s32 %s577, 3
        %s605 = sld [smem:[#allocation5 + %s604]]
        %s606 = sld [smem:[#allocation6 + %s604]]
        %s607 = scalar_lea.vmem [#allocation7], %s605
        %v608 = vld [vmem:[%s607] sm:$0x1]
        %609 = vst [vmem:[#allocation2 + $0x3] sm:$0x1] %v608
        %s610 = scalar_lea.vmem [#allocation7], %s606
        %v611 = vld [vmem:[%s610] sm:$0x1]
        %612 = vst [vmem:[#allocation3 + $0x3] sm:$0x1] %v611
        %s613 = sadd.s32 %s577, 4
        %s614 = sld [smem:[#allocation5 + %s613]]
        %s615 = sld [smem:[#allocation6 + %s613]]
        %s616 = scalar_lea.vmem [#allocation7], %s614
        %v617 = vld [vmem:[%s616] sm:$0x1]
        %618 = vst [vmem:[#allocation2 + $0x4] sm:$0x1] %v617
        %s619 = scalar_lea.vmem [#allocation7], %s615
        %v620 = vld [vmem:[%s619] sm:$0x1]
        %621 = vst [vmem:[#allocation3 + $0x4] sm:$0x1] %v620
        %s622 = sadd.s32 %s577, 5
        %s623 = sld [smem:[#allocation5 + %s622]]
        %s624 = sld [smem:[#allocation6 + %s622]]
        %s625 = scalar_lea.vmem [#allocation7], %s623
        %v626 = vld [vmem:[%s625] sm:$0x1]
        %627 = vst [vmem:[#allocation2 + $0x5] sm:$0x1] %v626
        %s628 = scalar_lea.vmem [#allocation7], %s624
        %v629 = vld [vmem:[%s628] sm:$0x1]
        %630 = vst [vmem:[#allocation3 + $0x5] sm:$0x1] %v629
        %s631 = sadd.s32 %s577, 6
        %s632 = sld [smem:[#allocation5 + %s631]]
        %s633 = sld [smem:[#allocation6 + %s631]]
        %s634 = scalar_lea.vmem [#allocation7], %s632
        %v635 = vld [vmem:[%s634] sm:$0x1]
        %636 = vst [vmem:[#allocation2 + $0x6] sm:$0x1] %v635
        %s637 = scalar_lea.vmem [#allocation7], %s633
        %v638 = vld [vmem:[%s637] sm:$0x1]
        %639 = vst [vmem:[#allocation3 + $0x6] sm:$0x1] %v638
        %s640 = sadd.s32 %s577, 7
        %s641 = sld [smem:[#allocation5 + %s640]]
        %s642 = sld [smem:[#allocation6 + %s640]]
        %s643 = scalar_lea.vmem [#allocation7], %s641
        %v644 = vld [vmem:[%s643] sm:$0x1]
        %645 = vst [vmem:[#allocation2 + $0x7] sm:$0x1] %v644
        %s646 = scalar_lea.vmem [#allocation7], %s642
        %v647 = vld [vmem:[%s646] sm:$0x1]
        %648 = vst [vmem:[#allocation3 + $0x7] sm:$0x1] %v647
        %v649 = vld [vmem:[#allocation2] sm:$0xff]
        %v650 = vld [vmem:[#allocation3] sm:$0xff]
        %v651 = vld [vmem:[%s505] sm:$0xff]
        %v652 = vld [vmem:[#allocation12] sm:$0xff]
        %v653 = vld [vmem:[#allocation12 + $0x8] sm:$0xff]
        %v654 = vld [vmem:[#allocation12 + $0x10] sm:$0xff]
        %v655 = vld [vmem:[#allocation12 + $0x18] sm:$0xff]
        %v656 = vld [vmem:[#allocation12 + $0x20] sm:$0xff]
        %v657 = vld [vmem:[#allocation12 + $0x28] sm:$0xff]
        %v658 = vld [vmem:[#allocation12 + $0x30] sm:$0xff]
        %v659 = vld [vmem:[#allocation12 + $0x38] sm:$0xff]
        %v660 = vld [vmem:[#allocation12 + $0x40] sm:$0xff]
        %v661 = vld [vmem:[#allocation12 + $0x48] sm:$0xff]
        %v662 = vld [vmem:[#allocation12 + $0x50] sm:$0xff]
        %v663 = vld [vmem:[#allocation12 + $0x58] sm:$0xff]
        %v664 = vld [vmem:[#allocation12 + $0x60] sm:$0xff]
        %v665 = vld [vmem:[#allocation12 + $0x68] sm:$0xff]
        %v666 = vld [vmem:[#allocation12 + $0x70] sm:$0xff]
        %v667 = vld [vmem:[#allocation12 + $0x78] sm:$0xff]
        %v668 = vld [vmem:[#allocation13] sm:$0xff]
        %v669 = vld [vmem:[#allocation13 + $0x8] sm:$0xff]
        %v670 = vld [vmem:[#allocation13 + $0x10] sm:$0xff]
        %v671 = vld [vmem:[#allocation13 + $0x18] sm:$0xff]
        %v672 = vld [vmem:[#allocation13 + $0x20] sm:$0xff]
        %v673 = vld [vmem:[#allocation13 + $0x28] sm:$0xff]
        %v674 = vld [vmem:[#allocation13 + $0x30] sm:$0xff]
        %v675 = vld [vmem:[#allocation13 + $0x38] sm:$0xff]
        %v676 = vld [vmem:[#allocation13 + $0x40] sm:$0xff]
        %v677 = vld [vmem:[#allocation13 + $0x48] sm:$0xff]
        %v678 = vld [vmem:[#allocation13 + $0x50] sm:$0xff]
        %v679 = vld [vmem:[#allocation13 + $0x58] sm:$0xff]
        %v680 = vld [vmem:[#allocation13 + $0x60] sm:$0xff]
        %v681 = vld [vmem:[#allocation13 + $0x68] sm:$0xff]
        %v682 = vld [vmem:[#allocation13 + $0x70] sm:$0xff]
        %v683 = vld [vmem:[#allocation13 + $0x78] sm:$0xff]
        %684 = vmatprep.subr.mxu0 0.0
        %685 = vmatpush1.msra.mxu0 %v668
        %686 = vmatprep.subr.mxu0 0.0
        %687 = vmatpush1.msra.mxu0 %v669
        %688 = vmatprep.subr.mxu0 0.0
        %689 = vmatpush1.msra.mxu0 %v670
        %690 = vmatprep.subr.mxu0 0.0
        %691 = vmatpush1.msra.mxu0 %v671
        %692 = vmatprep.subr.mxu0 0.0
        %693 = vmatpush1.msra.mxu0 %v672
        %694 = vmatprep.subr.mxu0 0.0
        %695 = vmatpush1.msra.mxu0 %v673
        %696 = vmatprep.subr.mxu0 0.0
        %697 = vmatpush1.msra.mxu0 %v674
        %698 = vmatprep.subr.mxu0 0.0
        %699 = vmatpush1.msra.mxu0 %v675
        %700 = vmatprep.subr.mxu0 0.0
        %701 = vmatpush1.msra.mxu0 %v676
        %702 = vmatprep.subr.mxu0 0.0
        %703 = vmatpush1.msra.mxu0 %v677
        %704 = vmatprep.subr.mxu0 0.0
        %705 = vmatpush1.msra.mxu0 %v678
        %706 = vmatprep.subr.mxu0 0.0
        %707 = vmatpush1.msra.mxu0 %v679
        %708 = vmatprep.subr.mxu0 0.0
        %709 = vmatpush1.msra.mxu0 %v680
        %710 = vmatprep.subr.mxu0 0.0
        %711 = vmatpush1.msra.mxu0 %v681
        %712 = vmatprep.subr.mxu0 0.0
        %713 = vmatpush1.msra.mxu0 %v682
        %714 = vmatprep.subr.mxu0 0.0
        %715 = vmatpush1.msra.mxu0 %v683
        %716 = vmatprep.subr.mxu0 0.0
        %717 = vmatpush1.msra.mxu0 0.0
        %718 = vmatprep.subr.mxu0 0.0
        %719 = vmatpush1.msra.mxu0 0.0
        %720 = vmatprep.subr.mxu0 0.0
        %721 = vmatpush1.msra.mxu0 0.0
        %722 = vmatprep.subr.mxu0 0.0
        %723 = vmatpush1.msra.mxu0 0.0
        %724 = vmatprep.subr.mxu0 0.0
        %725 = vmatpush1.msra.mxu0 0.0
        %726 = vmatprep.subr.mxu0 0.0
        %727 = vmatpush1.msra.mxu0 0.0
        %728 = vmatprep.subr.mxu0 0.0
        %729 = vmatpush1.msra.mxu0 0.0
        %730 = vmatprep.subr.mxu0 0.0
        %731 = vmatpush1.msra.mxu0 0.0
        %732 = vmatprep.subr.mxu0 0.0
        %733 = vmatpush1.msra.mxu0 0.0
        %734 = vmatprep.subr.mxu0 0.0
        %735 = vmatpush1.msra.mxu0 0.0
        %736 = vmatprep.subr.mxu0 0.0
        %737 = vmatpush1.msra.mxu0 0.0
        %738 = vmatprep.subr.mxu0 0.0
        %739 = vmatpush1.msra.mxu0 0.0
        %740 = vmatprep.subr.mxu0 0.0
        %741 = vmatpush1.msra.mxu0 0.0
        %742 = vmatprep.subr.mxu0 0.0
        %743 = vmatpush1.msra.mxu0 0.0
        %744 = vmatprep.subr.mxu0 0.0
        %745 = vmatpush1.msra.mxu0 0.0
        %746 = vmatprep.subr.mxu0 0.0
        %747 = vmatpush1.msra.mxu0 0.0
        %748 = vmatprep.mubr.f32.mxu0 0.0
        %749 = vmatmul.mubr.f32.gmra.mrb[0].mxu0 %v650
        %v750 = vpop.f32.mrb[0].mxu0
        %v751 = vadd.f32 0.0, %v750
        %v752 = vpop.f32.mrb[0].mxu0
        %753 = vdwg.mxu0
        %754 = vmatprep.subr.mxu0 0.0
        %755 = vmatpush1.msra.mxu0 %v652
        %756 = vmatprep.subr.mxu0 0.0
        %757 = vmatpush1.msra.mxu0 %v653
        %758 = vmatprep.subr.mxu0 0.0
        %759 = vmatpush1.msra.mxu0 %v654
        %760 = vmatprep.subr.mxu0 0.0
        %761 = vmatpush1.msra.mxu0 %v655
        %762 = vmatprep.subr.mxu0 0.0
        %763 = vmatpush1.msra.mxu0 %v656
        %764 = vmatprep.subr.mxu0 0.0
        %765 = vmatpush1.msra.mxu0 %v657
        %766 = vmatprep.subr.mxu0 0.0
        %767 = vmatpush1.msra.mxu0 %v658
        %768 = vmatprep.subr.mxu0 0.0
        %769 = vmatpush1.msra.mxu0 %v659
        %770 = vmatprep.subr.mxu0 0.0
        %771 = vmatpush1.msra.mxu0 %v660
        %772 = vmatprep.subr.mxu0 0.0
        %773 = vmatpush1.msra.mxu0 %v661
        %774 = vmatprep.subr.mxu0 0.0
        %775 = vmatpush1.msra.mxu0 %v662
        %776 = vmatprep.subr.mxu0 0.0
        %777 = vmatpush1.msra.mxu0 %v663
        %778 = vmatprep.subr.mxu0 0.0
        %779 = vmatpush1.msra.mxu0 %v664
        %780 = vmatprep.subr.mxu0 0.0
        %781 = vmatpush1.msra.mxu0 %v665
        %782 = vmatprep.subr.mxu0 0.0
        %783 = vmatpush1.msra.mxu0 %v666
        %784 = vmatprep.subr.mxu0 0.0
        %785 = vmatpush1.msra.mxu0 %v667
        %786 = vmatprep.subr.mxu0 0.0
        %787 = vmatpush1.msra.mxu0 0.0
        %788 = vmatprep.subr.mxu0 0.0
        %789 = vmatpush1.msra.mxu0 0.0
        %790 = vmatprep.subr.mxu0 0.0
        %791 = vmatpush1.msra.mxu0 0.0
        %792 = vmatprep.subr.mxu0 0.0
        %793 = vmatpush1.msra.mxu0 0.0
        %794 = vmatprep.subr.mxu0 0.0
        %795 = vmatpush1.msra.mxu0 0.0
        %796 = vmatprep.subr.mxu0 0.0
        %797 = vmatpush1.msra.mxu0 0.0
        %798 = vmatprep.subr.mxu0 0.0
        %799 = vmatpush1.msra.mxu0 0.0
        %800 = vmatprep.subr.mxu0 0.0
        %801 = vmatpush1.msra.mxu0 0.0
        %802 = vmatprep.subr.mxu0 0.0
        %803 = vmatpush1.msra.mxu0 0.0
        %804 = vmatprep.subr.mxu0 0.0
        %805 = vmatpush1.msra.mxu0 0.0
        %806 = vmatprep.subr.mxu0 0.0
        %807 = vmatpush1.msra.mxu0 0.0
        %808 = vmatprep.subr.mxu0 0.0
        %809 = vmatpush1.msra.mxu0 0.0
        %810 = vmatprep.subr.mxu0 0.0
        %811 = vmatpush1.msra.mxu0 0.0
        %812 = vmatprep.subr.mxu0 0.0
        %813 = vmatpush1.msra.mxu0 0.0
        %814 = vmatprep.subr.mxu0 0.0
        %815 = vmatpush1.msra.mxu0 0.0
        %816 = vmatprep.subr.mxu0 0.0
        %817 = vmatpush1.msra.mxu0 0.0
        %818 = vmatprep.mubr.f32.mxu0 0.0
        %819 = vmatmul.mubr.f32.gmra.mrb[0].mxu0 %v649
        %v820 = vpop.f32.mrb[0].mxu0
        %v821 = vadd.f32 %v751, %v820
        %v822 = vpop.f32.mrb[0].mxu0
        %823 = vdwg.mxu0
        %v824 = vld [vmem:[#allocation15] sm:$0xff]
        %v825 = vld [vmem:[#allocation15 + $0x8] sm:$0xff]
        %v826 = vld [vmem:[#allocation15 + $0x10] sm:$0xff]
        %v827 = vld [vmem:[#allocation15 + $0x18] sm:$0xff]
        %v828 = vld [vmem:[#allocation15 + $0x20] sm:$0xff]
        %v829 = vld [vmem:[#allocation15 + $0x28] sm:$0xff]
        %v830 = vld [vmem:[#allocation15 + $0x30] sm:$0xff]
        %v831 = vld [vmem:[#allocation15 + $0x38] sm:$0xff]
        %v832 = vld [vmem:[#allocation15 + $0x40] sm:$0xff]
        %v833 = vld [vmem:[#allocation15 + $0x48] sm:$0xff]
        %v834 = vld [vmem:[#allocation15 + $0x50] sm:$0xff]
        %v835 = vld [vmem:[#allocation15 + $0x58] sm:$0xff]
        %v836 = vld [vmem:[#allocation15 + $0x60] sm:$0xff]
        %v837 = vld [vmem:[#allocation15 + $0x68] sm:$0xff]
        %v838 = vld [vmem:[#allocation15 + $0x70] sm:$0xff]
        %v839 = vld [vmem:[#allocation15 + $0x78] sm:$0xff]
        %840 = vmatprep.subr.mxu0 0.0
        %841 = vmatpush1.msra.mxu0 %v824
        %842 = vmatprep.subr.mxu0 0.0
        %843 = vmatpush1.msra.mxu0 %v825
        %844 = vmatprep.subr.mxu0 0.0
        %845 = vmatpush1.msra.mxu0 %v826
        %846 = vmatprep.subr.mxu0 0.0
        %847 = vmatpush1.msra.mxu0 %v827
        %848 = vmatprep.subr.mxu0 0.0
        %849 = vmatpush1.msra.mxu0 %v828
        %850 = vmatprep.subr.mxu0 0.0
        %851 = vmatpush1.msra.mxu0 %v829
        %852 = vmatprep.subr.mxu0 0.0
        %853 = vmatpush1.msra.mxu0 %v830
        %854 = vmatprep.subr.mxu0 0.0
        %855 = vmatpush1.msra.mxu0 %v831
        %856 = vmatprep.subr.mxu0 0.0
        %857 = vmatpush1.msra.mxu0 %v832
        %858 = vmatprep.subr.mxu0 0.0
        %859 = vmatpush1.msra.mxu0 %v833
        %860 = vmatprep.subr.mxu0 0.0
        %861 = vmatpush1.msra.mxu0 %v834
        %862 = vmatprep.subr.mxu0 0.0
        %863 = vmatpush1.msra.mxu0 %v835
        %864 = vmatprep.subr.mxu0 0.0
        %865 = vmatpush1.msra.mxu0 %v836
        %866 = vmatprep.subr.mxu0 0.0
        %867 = vmatpush1.msra.mxu0 %v837
        %868 = vmatprep.subr.mxu0 0.0
        %869 = vmatpush1.msra.mxu0 %v838
        %870 = vmatprep.subr.mxu0 0.0
        %871 = vmatpush1.msra.mxu0 %v839
        %872 = vmatprep.subr.mxu0 0.0
        %873 = vmatpush1.msra.mxu0 0.0
        %874 = vmatprep.subr.mxu0 0.0
        %875 = vmatpush1.msra.mxu0 0.0
        %876 = vmatprep.subr.mxu0 0.0
        %877 = vmatpush1.msra.mxu0 0.0
        %878 = vmatprep.subr.mxu0 0.0
        %879 = vmatpush1.msra.mxu0 0.0
        %880 = vmatprep.subr.mxu0 0.0
        %881 = vmatpush1.msra.mxu0 0.0
        %882 = vmatprep.subr.mxu0 0.0
        %883 = vmatpush1.msra.mxu0 0.0
        %884 = vmatprep.subr.mxu0 0.0
        %885 = vmatpush1.msra.mxu0 0.0
        %886 = vmatprep.subr.mxu0 0.0
        %887 = vmatpush1.msra.mxu0 0.0
        %888 = vmatprep.subr.mxu0 0.0
        %889 = vmatpush1.msra.mxu0 0.0
        %890 = vmatprep.subr.mxu0 0.0
        %891 = vmatpush1.msra.mxu0 0.0
        %892 = vmatprep.subr.mxu0 0.0
        %893 = vmatpush1.msra.mxu0 0.0
        %894 = vmatprep.subr.mxu0 0.0
        %895 = vmatpush1.msra.mxu0 0.0
        %896 = vmatprep.subr.mxu0 0.0
        %897 = vmatpush1.msra.mxu0 0.0
        %898 = vmatprep.subr.mxu0 0.0
        %899 = vmatpush1.msra.mxu0 0.0
        %900 = vmatprep.subr.mxu0 0.0
        %901 = vmatpush1.msra.mxu0 0.0
        %902 = vmatprep.subr.mxu0 0.0
        %903 = vmatpush1.msra.mxu0 0.0
        %904 = vmatprep.mubr.f32.mxu0 0.0
        %905 = vmatmul.mubr.f32.gmra.mrb[0].mxu0 %v651
        %v906 = vpop.f32.mrb[0].mxu0
        %v907 = vadd.f32 0.0, %v906
        %v908 = vpop.f32.mrb[0].mxu0
        %909 = vdwg.mxu0
        %v910 = vadd.f32 %v821, %v907
        %v911 = vld [vmem:[%s7] sm:$0x1]
        %v913 = vlaneseq
        %v914 = vshrl.u32 %v913, 7
        %v915 = vsub.s32 0, %v914
        %v916 = vrot.slane %v911, %v915
        %v918 = vadd.f32 %v910, %v916
        %v919 = vmax.f32 %v918, 0.0
        %v920 = vld [vmem:[#allocation16] sm:$0xff]
        %v921 = vld [vmem:[#allocation16 + $0x8] sm:$0xff]
        %v922 = vld [vmem:[#allocation16 + $0x10] sm:$0xff]
        %v923 = vld [vmem:[#allocation16 + $0x18] sm:$0xff]
        %v924 = vld [vmem:[#allocation16 + $0x20] sm:$0xff]
        %v925 = vld [vmem:[#allocation16 + $0x28] sm:$0xff]
        %v926 = vld [vmem:[#allocation16 + $0x30] sm:$0xff]
        %v927 = vld [vmem:[#allocation16 + $0x38] sm:$0xff]
        %v928 = vld [vmem:[#allocation16 + $0x40] sm:$0xff]
        %v929 = vld [vmem:[#allocation16 + $0x48] sm:$0xff]
        %v930 = vld [vmem:[#allocation16 + $0x50] sm:$0xff]
        %v931 = vld [vmem:[#allocation16 + $0x58] sm:$0xff]
        %v932 = vld [vmem:[#allocation16 + $0x60] sm:$0xff]
        %v933 = vld [vmem:[#allocation16 + $0x68] sm:$0xff]
        %v934 = vld [vmem:[#allocation16 + $0x70] sm:$0xff]
        %v935 = vld [vmem:[#allocation16 + $0x78] sm:$0xff]
        %v936 = vld [vmem:[#allocation16 + $0x80] sm:$0xff]
        %v937 = vld [vmem:[#allocation16 + $0x88] sm:$0xff]
        %v938 = vld [vmem:[#allocation16 + $0x90] sm:$0xff]
        %v939 = vld [vmem:[#allocation16 + $0x98] sm:$0xff]
        %v940 = vld [vmem:[#allocation16 + $0xa0] sm:$0xff]
        %v941 = vld [vmem:[#allocation16 + $0xa8] sm:$0xff]
        %v942 = vld [vmem:[#allocation16 + $0xb0] sm:$0xff]
        %v943 = vld [vmem:[#allocation16 + $0xb8] sm:$0xff]
        %v944 = vld [vmem:[#allocation16 + $0xc0] sm:$0xff]
        %v945 = vld [vmem:[#allocation16 + $0xc8] sm:$0xff]
        %v946 = vld [vmem:[#allocation16 + $0xd0] sm:$0xff]
        %v947 = vld [vmem:[#allocation16 + $0xd8] sm:$0xff]
        %v948 = vld [vmem:[#allocation16 + $0xe0] sm:$0xff]
        %v949 = vld [vmem:[#allocation16 + $0xe8] sm:$0xff]
        %v950 = vld [vmem:[#allocation16 + $0xf0] sm:$0xff]
        %v951 = vld [vmem:[#allocation16 + $0xf8] sm:$0xff]
        %v952 = vld [vmem:[#allocation16 + $0x100] sm:$0xff]
        %v953 = vld [vmem:[#allocation16 + $0x108] sm:$0xff]
        %v954 = vld [vmem:[#allocation16 + $0x110] sm:$0xff]
        %v955 = vld [vmem:[#allocation16 + $0x118] sm:$0xff]
        %v956 = vld [vmem:[#allocation16 + $0x120] sm:$0xff]
        %v957 = vld [vmem:[#allocation16 + $0x128] sm:$0xff]
        %v958 = vld [vmem:[#allocation16 + $0x130] sm:$0xff]
        %v959 = vld [vmem:[#allocation16 + $0x138] sm:$0xff]
        %v960 = vld [vmem:[#allocation16 + $0x140] sm:$0xff]
        %v961 = vld [vmem:[#allocation16 + $0x148] sm:$0xff]
        %v962 = vld [vmem:[#allocation16 + $0x150] sm:$0xff]
        %v963 = vld [vmem:[#allocation16 + $0x158] sm:$0xff]
        %v964 = vld [vmem:[#allocation16 + $0x160] sm:$0xff]
        %v965 = vld [vmem:[#allocation16 + $0x168] sm:$0xff]
        %v966 = vld [vmem:[#allocation16 + $0x170] sm:$0xff]
        %v967 = vld [vmem:[#allocation16 + $0x178] sm:$0xff]
        %v968 = vld [vmem:[#allocation16 + $0x180] sm:$0xff]
        %v969 = vld [vmem:[#allocation16 + $0x188] sm:$0xff]
        %v970 = vld [vmem:[#allocation16 + $0x190] sm:$0xff]
        %v971 = vld [vmem:[#allocation16 + $0x198] sm:$0xff]
        %v972 = vld [vmem:[#allocation16 + $0x1a0] sm:$0xff]
        %v973 = vld [vmem:[#allocation16 + $0x1a8] sm:$0xff]
        %v974 = vld [vmem:[#allocation16 + $0x1b0] sm:$0xff]
        %v975 = vld [vmem:[#allocation16 + $0x1b8] sm:$0xff]
        %v976 = vld [vmem:[#allocation16 + $0x1c0] sm:$0xff]
        %v977 = vld [vmem:[#allocation16 + $0x1c8] sm:$0xff]
        %v978 = vld [vmem:[#allocation16 + $0x1d0] sm:$0xff]
        %v979 = vld [vmem:[#allocation16 + $0x1d8] sm:$0xff]
        %v980 = vld [vmem:[#allocation16 + $0x1e0] sm:$0xff]
        %v981 = vld [vmem:[#allocation16 + $0x1e8] sm:$0xff]
        %v982 = vld [vmem:[#allocation16 + $0x1f0] sm:$0xff]
        %v983 = vld [vmem:[#allocation16 + $0x1f8] sm:$0xff]
        %v984 = vld [vmem:[%s9] sm:$0xf]
        %v986 = vlaneseq
        %v987 = vshrl.u32 %v986, 7
        %v988 = vsub.s32 0, %v987
        %v989 = vrot.slane %v984, %v988
        %v990 = vlaneseq
        %v991 = vshrl.u32 %v990, 7
        %v992 = vsub.s32 1, %v991
        %v993 = vrot.slane %v984, %v992
        %v994 = vlaneseq
        %v995 = vshrl.u32 %v994, 7
        %v996 = vsub.s32 2, %v995
        %v997 = vrot.slane %v984, %v996
        %v998 = vlaneseq
        %v999 = vshrl.u32 %v998, 7
        %v1000 = vsub.s32 3, %v999
        %v1001 = vrot.slane %v984, %v1000
        %1006 = vmatprep.subr.mxu0 %v921
        %1007 = vmatpush1.msra.mxu0 %v920
        %1008 = vmatprep.subr.mxu0 %v925
        %1009 = vmatpush1.msra.mxu0 %v924
        %1010 = vmatprep.subr.mxu0 %v929
        %1011 = vmatpush1.msra.mxu0 %v928
        %1012 = vmatprep.subr.mxu0 %v933
        %1013 = vmatpush1.msra.mxu0 %v932
        %1014 = vmatprep.subr.mxu0 %v937
        %1015 = vmatpush1.msra.mxu0 %v936
        %1016 = vmatprep.subr.mxu0 %v941
        %1017 = vmatpush1.msra.mxu0 %v940
        %1018 = vmatprep.subr.mxu0 %v945
        %1019 = vmatpush1.msra.mxu0 %v944
        %1020 = vmatprep.subr.mxu0 %v949
        %1021 = vmatpush1.msra.mxu0 %v948
        %1022 = vmatprep.subr.mxu0 %v953
        %1023 = vmatpush1.msra.mxu0 %v952
        %1024 = vmatprep.subr.mxu0 %v957
        %1025 = vmatpush1.msra.mxu0 %v956
        %1026 = vmatprep.subr.mxu0 %v961
        %1027 = vmatpush1.msra.mxu0 %v960
        %1028 = vmatprep.subr.mxu0 %v965
        %1029 = vmatpush1.msra.mxu0 %v964
        %1030 = vmatprep.subr.mxu0 %v969
        %1031 = vmatpush1.msra.mxu0 %v968
        %1032 = vmatprep.subr.mxu0 %v973
        %1033 = vmatpush1.msra.mxu0 %v972
        %1034 = vmatprep.subr.mxu0 %v977
        %1035 = vmatpush1.msra.mxu0 %v976
        %1036 = vmatprep.subr.mxu0 %v981
        %1037 = vmatpush1.msra.mxu0 %v980
        %1038 = vmatprep.subr.mxu0 0.0
        %1039 = vmatpush1.msra.mxu0 0.0
        %1040 = vmatprep.subr.mxu0 0.0
        %1041 = vmatpush1.msra.mxu0 0.0
        %1042 = vmatprep.subr.mxu0 0.0
        %1043 = vmatpush1.msra.mxu0 0.0
        %1044 = vmatprep.subr.mxu0 0.0
        %1045 = vmatpush1.msra.mxu0 0.0
        %1046 = vmatprep.subr.mxu0 0.0
        %1047 = vmatpush1.msra.mxu0 0.0
        %1048 = vmatprep.subr.mxu0 0.0
        %1049 = vmatpush1.msra.mxu0 0.0
        %1050 = vmatprep.subr.mxu0 0.0
        %1051 = vmatpush1.msra.mxu0 0.0
        %1052 = vmatprep.subr.mxu0 0.0
        %1053 = vmatpush1.msra.mxu0 0.0
        %1054 = vmatprep.subr.mxu0 0.0
        %1055 = vmatpush1.msra.mxu0 0.0
        %1056 = vmatprep.subr.mxu0 0.0
        %1057 = vmatpush1.msra.mxu0 0.0
        %1058 = vmatprep.subr.mxu0 0.0
        %1059 = vmatpush1.msra.mxu0 0.0
        %1060 = vmatprep.subr.mxu0 0.0
        %1061 = vmatpush1.msra.mxu0 0.0
        %1062 = vmatprep.subr.mxu0 0.0
        %1063 = vmatpush1.msra.mxu0 0.0
        %1064 = vmatprep.subr.mxu0 0.0
        %1065 = vmatpush1.msra.mxu0 0.0
        %1066 = vmatprep.subr.mxu0 0.0
        %1067 = vmatpush1.msra.mxu0 0.0
        %1068 = vmatprep.subr.mxu0 0.0
        %1069 = vmatpush1.msra.mxu0 0.0
        %1070 = vmatprep.mubr.f32.mxu0 0.0
        %1071 = vmatmul.mubr.f32.gmra.mrb[0].mxu0 %v919
        %v1072 = vpop.f32.mrb[0].mxu0
        %v1073 = vadd.f32 %v989, %v1072
        %v1074 = vpop.f32.mrb[0].mxu0
        %v1075 = vadd.f32 %v993, %v1074
        %1076 = vdwg.mxu0
        %1077 = vmatprep.subr.mxu0 %v923
        %1078 = vmatpush1.msra.mxu0 %v922
        %1079 = vmatprep.subr.mxu0 %v927
        %1080 = vmatpush1.msra.mxu0 %v926
        %1081 = vmatprep.subr.mxu0 %v931
        %1082 = vmatpush1.msra.mxu0 %v930
        %1083 = vmatprep.subr.mxu0 %v935
        %1084 = vmatpush1.msra.mxu0 %v934
        %1085 = vmatprep.subr.mxu0 %v939
        %1086 = vmatpush1.msra.mxu0 %v938
        %1087 = vmatprep.subr.mxu0 %v943
        %1088 = vmatpush1.msra.mxu0 %v942
        %1089 = vmatprep.subr.mxu0 %v947
        %1090 = vmatpush1.msra.mxu0 %v946
        %1091 = vmatprep.subr.mxu0 %v951
        %1092 = vmatpush1.msra.mxu0 %v950
        %1093 = vmatprep.subr.mxu0 %v955
        %1094 = vmatpush1.msra.mxu0 %v954
        %1095 = vmatprep.subr.mxu0 %v959
        %1096 = vmatpush1.msra.mxu0 %v958
        %1097 = vmatprep.subr.mxu0 %v963
        %1098 = vmatpush1.msra.mxu0 %v962
        %1099 = vmatprep.subr.mxu0 %v967
        %1100 = vmatpush1.msra.mxu0 %v966
        %1101 = vmatprep.subr.mxu0 %v971
        %1102 = vmatpush1.msra.mxu0 %v970
        %1103 = vmatprep.subr.mxu0 %v975
        %1104 = vmatpush1.msra.mxu0 %v974
        %1105 = vmatprep.subr.mxu0 %v979
        %1106 = vmatpush1.msra.mxu0 %v978
        %1107 = vmatprep.subr.mxu0 %v983
        %1108 = vmatpush1.msra.mxu0 %v982
        %1109 = vmatprep.subr.mxu0 0.0
        %1110 = vmatpush1.msra.mxu0 0.0
        %1111 = vmatprep.subr.mxu0 0.0
        %1112 = vmatpush1.msra.mxu0 0.0
        %1113 = vmatprep.subr.mxu0 0.0
        %1114 = vmatpush1.msra.mxu0 0.0
        %1115 = vmatprep.subr.mxu0 0.0
        %1116 = vmatpush1.msra.mxu0 0.0
        %1117 = vmatprep.subr.mxu0 0.0
        %1118 = vmatpush1.msra.mxu0 0.0
        %1119 = vmatprep.subr.mxu0 0.0
        %1120 = vmatpush1.msra.mxu0 0.0
        %1121 = vmatprep.subr.mxu0 0.0
        %1122 = vmatpush1.msra.mxu0 0.0
        %1123 = vmatprep.subr.mxu0 0.0
        %1124 = vmatpush1.msra.mxu0 0.0
        %1125 = vmatprep.subr.mxu0 0.0
        %1126 = vmatpush1.msra.mxu0 0.0
        %1127 = vmatprep.subr.mxu0 0.0
        %1128 = vmatpush1.msra.mxu0 0.0
        %1129 = vmatprep.subr.mxu0 0.0
        %1130 = vmatpush1.msra.mxu0 0.0
        %1131 = vmatprep.subr.mxu0 0.0
        %1132 = vmatpush1.msra.mxu0 0.0
        %1133 = vmatprep.subr.mxu0 0.0
        %1134 = vmatpush1.msra.mxu0 0.0
        %1135 = vmatprep.subr.mxu0 0.0
        %1136 = vmatpush1.msra.mxu0 0.0
        %1137 = vmatprep.subr.mxu0 0.0
        %1138 = vmatpush1.msra.mxu0 0.0
        %1139 = vmatprep.subr.mxu0 0.0
        %1140 = vmatpush1.msra.mxu0 0.0
        %1141 = vmatprep.mubr.f32.mxu0 0.0
        %1142 = vmatmul.mubr.f32.gmra.mrb[0].mxu0 %v919
        %v1143 = vpop.f32.mrb[0].mxu0
        %v1144 = vadd.f32 %v997, %v1143
        %v1145 = vpop.f32.mrb[0].mxu0
        %v1146 = vadd.f32 %v1001, %v1145
        %1147 = vdwg.mxu0
        %v1148 = vld [vmem:[#allocation18] sm:$0xff]
        %v1149 = vld [vmem:[#allocation18 + $0x8] sm:$0xff]
        %v1150 = vld [vmem:[#allocation18 + $0x10] sm:$0xff]
        %v1151 = vld [vmem:[#allocation18 + $0x18] sm:$0xff]
        %v1152 = vld [vmem:[#allocation18 + $0x20] sm:$0xff]
        %v1153 = vld [vmem:[#allocation18 + $0x28] sm:$0xff]
        %v1154 = vld [vmem:[#allocation18 + $0x30] sm:$0xff]
        %v1155 = vld [vmem:[#allocation18 + $0x38] sm:$0xff]
        %v1156 = vld [vmem:[#allocation18 + $0x40] sm:$0xff]
        %v1157 = vld [vmem:[#allocation18 + $0x48] sm:$0xff]
        %v1158 = vld [vmem:[#allocation18 + $0x50] sm:$0xff]
        %v1159 = vld [vmem:[#allocation18 + $0x58] sm:$0xff]
        %v1160 = vld [vmem:[#allocation18 + $0x60] sm:$0xff]
        %v1161 = vld [vmem:[#allocation18 + $0x68] sm:$0xff]
        %v1162 = vld [vmem:[#allocation18 + $0x70] sm:$0xff]
        %v1163 = vld [vmem:[#allocation18 + $0x78] sm:$0xff]
        %v1164 = vld [vmem:[%s11] sm:$0x1]
        %v1166 = vlaneseq
        %v1167 = vshrl.u32 %v1166, 7
        %v1168 = vsub.s32 0, %v1167
        %v1169 = vrot.slane %v1164, %v1168
        %1171 = vmatprep.subr.mxu0 0.0
        %1172 = vmatpush1.msra.mxu0 %v1148
        %1173 = vmatprep.subr.mxu0 0.0
        %1174 = vmatpush1.msra.mxu0 %v1149
        %1175 = vmatprep.subr.mxu0 0.0
        %1176 = vmatpush1.msra.mxu0 %v1150
        %1177 = vmatprep.subr.mxu0 0.0
        %1178 = vmatpush1.msra.mxu0 %v1151
        %1179 = vmatprep.subr.mxu0 0.0
        %1180 = vmatpush1.msra.mxu0 %v1152
        %1181 = vmatprep.subr.mxu0 0.0
        %1182 = vmatpush1.msra.mxu0 %v1153
        %1183 = vmatprep.subr.mxu0 0.0
        %1184 = vmatpush1.msra.mxu0 %v1154
        %1185 = vmatprep.subr.mxu0 0.0
        %1186 = vmatpush1.msra.mxu0 %v1155
        %1187 = vmatprep.subr.mxu0 0.0
        %1188 = vmatpush1.msra.mxu0 %v1156
        %1189 = vmatprep.subr.mxu0 0.0
        %1190 = vmatpush1.msra.mxu0 %v1157
        %1191 = vmatprep.subr.mxu0 0.0
        %1192 = vmatpush1.msra.mxu0 %v1158
        %1193 = vmatprep.subr.mxu0 0.0
        %1194 = vmatpush1.msra.mxu0 %v1159
        %1195 = vmatprep.subr.mxu0 0.0
        %1196 = vmatpush1.msra.mxu0 %v1160
        %1197 = vmatprep.subr.mxu0 0.0
        %1198 = vmatpush1.msra.mxu0 %v1161
        %1199 = vmatprep.subr.mxu0 0.0
        %1200 = vmatpush1.msra.mxu0 %v1162
        %1201 = vmatprep.subr.mxu0 0.0
        %1202 = vmatpush1.msra.mxu0 %v1163
        %1203 = vmatprep.subr.mxu0 0.0
        %1204 = vmatpush1.msra.mxu0 0.0
        %1205 = vmatprep.subr.mxu0 0.0
        %1206 = vmatpush1.msra.mxu0 0.0
        %1207 = vmatprep.subr.mxu0 0.0
        %1208 = vmatpush1.msra.mxu0 0.0
        %1209 = vmatprep.subr.mxu0 0.0
        %1210 = vmatpush1.msra.mxu0 0.0
        %1211 = vmatprep.subr.mxu0 0.0
        %1212 = vmatpush1.msra.mxu0 0.0
        %1213 = vmatprep.subr.mxu0 0.0
        %1214 = vmatpush1.msra.mxu0 0.0
        %1215 = vmatprep.subr.mxu0 0.0
        %1216 = vmatpush1.msra.mxu0 0.0
        %1217 = vmatprep.subr.mxu0 0.0
        %1218 = vmatpush1.msra.mxu0 0.0
        %1219 = vmatprep.subr.mxu0 0.0
        %1220 = vmatpush1.msra.mxu0 0.0
        %1221 = vmatprep.subr.mxu0 0.0
        %1222 = vmatpush1.msra.mxu0 0.0
        %1223 = vmatprep.subr.mxu0 0.0
        %1224 = vmatpush1.msra.mxu0 0.0
        %1225 = vmatprep.subr.mxu0 0.0
        %1226 = vmatpush1.msra.mxu0 0.0
        %1227 = vmatprep.subr.mxu0 0.0
        %1228 = vmatpush1.msra.mxu0 0.0
        %1229 = vmatprep.subr.mxu0 0.0
        %1230 = vmatpush1.msra.mxu0 0.0
        %1231 = vmatprep.subr.mxu0 0.0
        %1232 = vmatpush1.msra.mxu0 0.0
        %1233 = vmatprep.subr.mxu0 0.0
        %1234 = vmatpush1.msra.mxu0 0.0
        %1235 = vmatprep.mubr.f32.mxu0 0.0
        %1236 = vmatmul.mubr.f32.gmra.mrb[0].mxu0 %v919
        %v1237 = vpop.f32.mrb[0].mxu0
        %v1238 = vadd.f32 %v1169, %v1237
        %v1239 = vpop.f32.mrb[0].mxu0
        %1240 = vdwg.mxu0
        %v1241 = vxor.u32 %v1238, 2147483648
        %v1242 = vmul.f32 %v1241, 1.442695
        %v1243 = vpow.pop %v1242
        %v1244 = vadd.f32 %v1243, 1.0
        %v1245 = vrcp.pop %v1244
        %v1246 = vmul.f32 1.0, %v1245
        %v1247 = vmul.f32 %v1073, %v1246
        %v1248 = vmul.f32 %v1075, %v1246
        %v1249 = vmul.f32 %v1144, %v1246
        %v1250 = vmul.f32 %v1146, %v1246
        %1251 = vst [vmem:[%s569] sm:$0xff] %v1247
        %1252 = vst [vmem:[%s569 + $0x8] sm:$0xff] %v1248
        %1253 = vst [vmem:[%s569 + $0x10] sm:$0xff] %v1249
        %1254 = vst [vmem:[%s569 + $0x18] sm:$0xff] %v1250
        %v1255 = vld [vmem:[#allocation19] sm:$0xff]
        %v1256 = vld [vmem:[#allocation19 + $0x8] sm:$0xff]
        %v1257 = vld [vmem:[#allocation19 + $0x10] sm:$0xff]
        %v1258 = vld [vmem:[#allocation19 + $0x18] sm:$0xff]
        %v1259 = vld [vmem:[#allocation19 + $0x20] sm:$0xff]
        %v1260 = vld [vmem:[#allocation19 + $0x28] sm:$0xff]
        %v1261 = vld [vmem:[#allocation19 + $0x30] sm:$0xff]
        %v1262 = vld [vmem:[#allocation19 + $0x38] sm:$0xff]
        %v1263 = vld [vmem:[#allocation19 + $0x40] sm:$0xff]
        %v1264 = vld [vmem:[#allocation19 + $0x48] sm:$0xff]
        %v1265 = vld [vmem:[#allocation19 + $0x50] sm:$0xff]
        %v1266 = vld [vmem:[#allocation19 + $0x58] sm:$0xff]
        %v1267 = vld [vmem:[#allocation19 + $0x60] sm:$0xff]
        %v1268 = vld [vmem:[#allocation19 + $0x68] sm:$0xff]
        %v1269 = vld [vmem:[#allocation19 + $0x70] sm:$0xff]
        %v1270 = vld [vmem:[#allocation19 + $0x78] sm:$0xff]
        %s1271 = scalar_lea.vmem [#allocation19], 128
        %v1272 = vld [vmem:[%s1271] sm:$0xff]
        %v1273 = vld [vmem:[%s1271 + $0x8] sm:$0xff]
        %v1274 = vld [vmem:[%s1271 + $0x10] sm:$0xff]
        %v1275 = vld [vmem:[%s1271 + $0x18] sm:$0xff]
        %v1276 = vld [vmem:[%s1271 + $0x20] sm:$0xff]
        %v1277 = vld [vmem:[%s1271 + $0x28] sm:$0xff]
        %v1278 = vld [vmem:[%s1271 + $0x30] sm:$0xff]
        %v1279 = vld [vmem:[%s1271 + $0x38] sm:$0xff]
        %v1280 = vld [vmem:[%s1271 + $0x40] sm:$0xff]
        %v1281 = vld [vmem:[%s1271 + $0x48] sm:$0xff]
        %v1282 = vld [vmem:[%s1271 + $0x50] sm:$0xff]
        %v1283 = vld [vmem:[%s1271 + $0x58] sm:$0xff]
        %v1284 = vld [vmem:[%s1271 + $0x60] sm:$0xff]
        %v1285 = vld [vmem:[%s1271 + $0x68] sm:$0xff]
        %v1286 = vld [vmem:[%s1271 + $0x70] sm:$0xff]
        %v1287 = vld [vmem:[%s1271 + $0x78] sm:$0xff]
        %1288 = vmatprep.subr.mxu0 0.0
        %1289 = vmatpush1.msra.mxu0 %v1272
        %1290 = vmatprep.subr.mxu0 0.0
        %1291 = vmatpush1.msra.mxu0 %v1273
        %1292 = vmatprep.subr.mxu0 0.0
        %1293 = vmatpush1.msra.mxu0 %v1274
        %1294 = vmatprep.subr.mxu0 0.0
        %1295 = vmatpush1.msra.mxu0 %v1275
        %1296 = vmatprep.subr.mxu0 0.0
        %1297 = vmatpush1.msra.mxu0 %v1276
        %1298 = vmatprep.subr.mxu0 0.0
        %1299 = vmatpush1.msra.mxu0 %v1277
        %1300 = vmatprep.subr.mxu0 0.0
        %1301 = vmatpush1.msra.mxu0 %v1278
        %1302 = vmatprep.subr.mxu0 0.0
        %1303 = vmatpush1.msra.mxu0 %v1279
        %1304 = vmatprep.subr.mxu0 0.0
        %1305 = vmatpush1.msra.mxu0 %v1280
        %1306 = vmatprep.subr.mxu0 0.0
        %1307 = vmatpush1.msra.mxu0 %v1281
        %1308 = vmatprep.subr.mxu0 0.0
        %1309 = vmatpush1.msra.mxu0 %v1282
        %1310 = vmatprep.subr.mxu0 0.0
        %1311 = vmatpush1.msra.mxu0 %v1283
        %1312 = vmatprep.subr.mxu0 0.0
        %1313 = vmatpush1.msra.mxu0 %v1284
        %1314 = vmatprep.subr.mxu0 0.0
        %1315 = vmatpush1.msra.mxu0 %v1285
        %1316 = vmatprep.subr.mxu0 0.0
        %1317 = vmatpush1.msra.mxu0 %v1286
        %1318 = vmatprep.subr.mxu0 0.0
        %1319 = vmatpush1.msra.mxu0 %v1287
        %1320 = vmatprep.subr.mxu0 0.0
        %1321 = vmatpush1.msra.mxu0 0.0
        %1322 = vmatprep.subr.mxu0 0.0
        %1323 = vmatpush1.msra.mxu0 0.0
        %1324 = vmatprep.subr.mxu0 0.0
        %1325 = vmatpush1.msra.mxu0 0.0
        %1326 = vmatprep.subr.mxu0 0.0
        %1327 = vmatpush1.msra.mxu0 0.0
        %1328 = vmatprep.subr.mxu0 0.0
        %1329 = vmatpush1.msra.mxu0 0.0
        %1330 = vmatprep.subr.mxu0 0.0
        %1331 = vmatpush1.msra.mxu0 0.0
        %1332 = vmatprep.subr.mxu0 0.0
        %1333 = vmatpush1.msra.mxu0 0.0
        %1334 = vmatprep.subr.mxu0 0.0
        %1335 = vmatpush1.msra.mxu0 0.0
        %1336 = vmatprep.subr.mxu0 0.0
        %1337 = vmatpush1.msra.mxu0 0.0
        %1338 = vmatprep.subr.mxu0 0.0
        %1339 = vmatpush1.msra.mxu0 0.0
        %1340 = vmatprep.subr.mxu0 0.0
        %1341 = vmatpush1.msra.mxu0 0.0
        %1342 = vmatprep.subr.mxu0 0.0
        %1343 = vmatpush1.msra.mxu0 0.0
        %1344 = vmatprep.subr.mxu0 0.0
        %1345 = vmatpush1.msra.mxu0 0.0
        %1346 = vmatprep.subr.mxu0 0.0
        %1347 = vmatpush1.msra.mxu0 0.0
        %1348 = vmatprep.subr.mxu0 0.0
        %1349 = vmatpush1.msra.mxu0 0.0
        %1350 = vmatprep.subr.mxu0 0.0
        %1351 = vmatpush1.msra.mxu0 0.0
        %1352 = vmatprep.mubr.f32.mxu0 0.0
        %1353 = vmatmul.mubr.f32.gmra.mrb[0].mxu0 %v1248
        %v1354 = vpop.f32.mrb[0].mxu0
        %v1355 = vadd.f32 0.0, %v1354
        %v1356 = vpop.f32.mrb[0].mxu0
        %1357 = vdwg.mxu0
        %1358 = vmatprep.subr.mxu0 0.0
        %1359 = vmatpush1.msra.mxu0 %v1255
        %1360 = vmatprep.subr.mxu0 0.0
        %1361 = vmatpush1.msra.mxu0 %v1256
        %1362 = vmatprep.subr.mxu0 0.0
        %1363 = vmatpush1.msra.mxu0 %v1257
        %1364 = vmatprep.subr.mxu0 0.0
        %1365 = vmatpush1.msra.mxu0 %v1258
        %1366 = vmatprep.subr.mxu0 0.0
        %1367 = vmatpush1.msra.mxu0 %v1259
        %1368 = vmatprep.subr.mxu0 0.0
        %1369 = vmatpush1.msra.mxu0 %v1260
        %1370 = vmatprep.subr.mxu0 0.0
        %1371 = vmatpush1.msra.mxu0 %v1261
        %1372 = vmatprep.subr.mxu0 0.0
        %1373 = vmatpush1.msra.mxu0 %v1262
        %1374 = vmatprep.subr.mxu0 0.0
        %1375 = vmatpush1.msra.mxu0 %v1263
        %1376 = vmatprep.subr.mxu0 0.0
        %1377 = vmatpush1.msra.mxu0 %v1264
        %1378 = vmatprep.subr.mxu0 0.0
        %1379 = vmatpush1.msra.mxu0 %v1265
        %1380 = vmatprep.subr.mxu0 0.0
        %1381 = vmatpush1.msra.mxu0 %v1266
        %1382 = vmatprep.subr.mxu0 0.0
        %1383 = vmatpush1.msra.mxu0 %v1267
        %1384 = vmatprep.subr.mxu0 0.0
        %1385 = vmatpush1.msra.mxu0 %v1268
        %1386 = vmatprep.subr.mxu0 0.0
        %1387 = vmatpush1.msra.mxu0 %v1269
        %1388 = vmatprep.subr.mxu0 0.0
        %1389 = vmatpush1.msra.mxu0 %v1270
        %1390 = vmatprep.subr.mxu0 0.0
        %1391 = vmatpush1.msra.mxu0 0.0
        %1392 = vmatprep.subr.mxu0 0.0
        %1393 = vmatpush1.msra.mxu0 0.0
        %1394 = vmatprep.subr.mxu0 0.0
        %1395 = vmatpush1.msra.mxu0 0.0
        %1396 = vmatprep.subr.mxu0 0.0
        %1397 = vmatpush1.msra.mxu0 0.0
        %1398 = vmatprep.subr.mxu0 0.0
        %1399 = vmatpush1.msra.mxu0 0.0
        %1400 = vmatprep.subr.mxu0 0.0
        %1401 = vmatpush1.msra.mxu0 0.0
        %1402 = vmatprep.subr.mxu0 0.0
        %1403 = vmatpush1.msra.mxu0 0.0
        %1404 = vmatprep.subr.mxu0 0.0
        %1405 = vmatpush1.msra.mxu0 0.0
        %1406 = vmatprep.subr.mxu0 0.0
        %1407 = vmatpush1.msra.mxu0 0.0
        %1408 = vmatprep.subr.mxu0 0.0
        %1409 = vmatpush1.msra.mxu0 0.0
        %1410 = vmatprep.subr.mxu0 0.0
        %1411 = vmatpush1.msra.mxu0 0.0
        %1412 = vmatprep.subr.mxu0 0.0
        %1413 = vmatpush1.msra.mxu0 0.0
        %1414 = vmatprep.subr.mxu0 0.0
        %1415 = vmatpush1.msra.mxu0 0.0
        %1416 = vmatprep.subr.mxu0 0.0
        %1417 = vmatpush1.msra.mxu0 0.0
        %1418 = vmatprep.subr.mxu0 0.0
        %1419 = vmatpush1.msra.mxu0 0.0
        %1420 = vmatprep.subr.mxu0 0.0
        %1421 = vmatpush1.msra.mxu0 0.0
        %1422 = vmatprep.mubr.f32.mxu0 0.0
        %1423 = vmatmul.mubr.f32.gmra.mrb[0].mxu0 %v1247
        %v1424 = vpop.f32.mrb[0].mxu0
        %v1425 = vadd.f32 %v1355, %v1424
        %v1426 = vpop.f32.mrb[0].mxu0
        %1427 = vdwg.mxu0
        %s1428 = scalar_lea.vmem [#allocation19], 256
        %v1429 = vld [vmem:[%s1428] sm:$0xff]
        %v1430 = vld [vmem:[%s1428 + $0x8] sm:$0xff]
        %v1431 = vld [vmem:[%s1428 + $0x10] sm:$0xff]
        %v1432 = vld [vmem:[%s1428 + $0x18] sm:$0xff]
        %v1433 = vld [vmem:[%s1428 + $0x20] sm:$0xff]
        %v1434 = vld [vmem:[%s1428 + $0x28] sm:$0xff]
        %v1435 = vld [vmem:[%s1428 + $0x30] sm:$0xff]
        %v1436 = vld [vmem:[%s1428 + $0x38] sm:$0xff]
        %v1437 = vld [vmem:[%s1428 + $0x40] sm:$0xff]
        %v1438 = vld [vmem:[%s1428 + $0x48] sm:$0xff]
        %v1439 = vld [vmem:[%s1428 + $0x50] sm:$0xff]
        %v1440 = vld [vmem:[%s1428 + $0x58] sm:$0xff]
        %v1441 = vld [vmem:[%s1428 + $0x60] sm:$0xff]
        %v1442 = vld [vmem:[%s1428 + $0x68] sm:$0xff]
        %v1443 = vld [vmem:[%s1428 + $0x70] sm:$0xff]
        %v1444 = vld [vmem:[%s1428 + $0x78] sm:$0xff]
        %1445 = vmatprep.subr.mxu0 0.0
        %1446 = vmatpush1.msra.mxu0 %v1429
        %1447 = vmatprep.subr.mxu0 0.0
        %1448 = vmatpush1.msra.mxu0 %v1430
        %1449 = vmatprep.subr.mxu0 0.0
        %1450 = vmatpush1.msra.mxu0 %v1431
        %1451 = vmatprep.subr.mxu0 0.0
        %1452 = vmatpush1.msra.mxu0 %v1432
        %1453 = vmatprep.subr.mxu0 0.0
        %1454 = vmatpush1.msra.mxu0 %v1433
        %1455 = vmatprep.subr.mxu0 0.0
        %1456 = vmatpush1.msra.mxu0 %v1434
        %1457 = vmatprep.subr.mxu0 0.0
        %1458 = vmatpush1.msra.mxu0 %v1435
        %1459 = vmatprep.subr.mxu0 0.0
        %1460 = vmatpush1.msra.mxu0 %v1436
        %1461 = vmatprep.subr.mxu0 0.0
        %1462 = vmatpush1.msra.mxu0 %v1437
        %1463 = vmatprep.subr.mxu0 0.0
        %1464 = vmatpush1.msra.mxu0 %v1438
        %1465 = vmatprep.subr.mxu0 0.0
        %1466 = vmatpush1.msra.mxu0 %v1439
        %1467 = vmatprep.subr.mxu0 0.0
        %1468 = vmatpush1.msra.mxu0 %v1440
        %1469 = vmatprep.subr.mxu0 0.0
        %1470 = vmatpush1.msra.mxu0 %v1441
        %1471 = vmatprep.subr.mxu0 0.0
        %1472 = vmatpush1.msra.mxu0 %v1442
        %1473 = vmatprep.subr.mxu0 0.0
        %1474 = vmatpush1.msra.mxu0 %v1443
        %1475 = vmatprep.subr.mxu0 0.0
        %1476 = vmatpush1.msra.mxu0 %v1444
        %1477 = vmatprep.subr.mxu0 0.0
        %1478 = vmatpush1.msra.mxu0 0.0
        %1479 = vmatprep.subr.mxu0 0.0
        %1480 = vmatpush1.msra.mxu0 0.0
        %1481 = vmatprep.subr.mxu0 0.0
        %1482 = vmatpush1.msra.mxu0 0.0
        %1483 = vmatprep.subr.mxu0 0.0
        %1484 = vmatpush1.msra.mxu0 0.0
        %1485 = vmatprep.subr.mxu0 0.0
        %1486 = vmatpush1.msra.mxu0 0.0
        %1487 = vmatprep.subr.mxu0 0.0
        %1488 = vmatpush1.msra.mxu0 0.0
        %1489 = vmatprep.subr.mxu0 0.0
        %1490 = vmatpush1.msra.mxu0 0.0
        %1491 = vmatprep.subr.mxu0 0.0
        %1492 = vmatpush1.msra.mxu0 0.0
        %1493 = vmatprep.subr.mxu0 0.0
        %1494 = vmatpush1.msra.mxu0 0.0
        %1495 = vmatprep.subr.mxu0 0.0
        %1496 = vmatpush1.msra.mxu0 0.0
        %1497 = vmatprep.subr.mxu0 0.0
        %1498 = vmatpush1.msra.mxu0 0.0
        %1499 = vmatprep.subr.mxu0 0.0
        %1500 = vmatpush1.msra.mxu0 0.0
        %1501 = vmatprep.subr.mxu0 0.0
        %1502 = vmatpush1.msra.mxu0 0.0
        %1503 = vmatprep.subr.mxu0 0.0
        %1504 = vmatpush1.msra.mxu0 0.0
        %1505 = vmatprep.subr.mxu0 0.0
        %1506 = vmatpush1.msra.mxu0 0.0
        %1507 = vmatprep.subr.mxu0 0.0
        %1508 = vmatpush1.msra.mxu0 0.0
        %1509 = vmatprep.mubr.f32.mxu0 0.0
        %1510 = vmatmul.mubr.f32.gmra.mrb[0].mxu0 %v1249
        %v1511 = vpop.f32.mrb[0].mxu0
        %v1512 = vadd.f32 0.0, %v1511
        %v1513 = vpop.f32.mrb[0].mxu0
        %1514 = vdwg.mxu0
        %v1515 = vadd.f32 %v1425, %v1512
        %s1516 = scalar_lea.vmem [#allocation19], 384
        %v1517 = vld [vmem:[%s1516] sm:$0xff]
        %v1518 = vld [vmem:[%s1516 + $0x8] sm:$0xff]
        %v1519 = vld [vmem:[%s1516 + $0x10] sm:$0xff]
        %v1520 = vld [vmem:[%s1516 + $0x18] sm:$0xff]
        %v1521 = vld [vmem:[%s1516 + $0x20] sm:$0xff]
        %v1522 = vld [vmem:[%s1516 + $0x28] sm:$0xff]
        %v1523 = vld [vmem:[%s1516 + $0x30] sm:$0xff]
        %v1524 = vld [vmem:[%s1516 + $0x38] sm:$0xff]
        %v1525 = vld [vmem:[%s1516 + $0x40] sm:$0xff]
        %v1526 = vld [vmem:[%s1516 + $0x48] sm:$0xff]
        %v1527 = vld [vmem:[%s1516 + $0x50] sm:$0xff]
        %v1528 = vld [vmem:[%s1516 + $0x58] sm:$0xff]
        %v1529 = vld [vmem:[%s1516 + $0x60] sm:$0xff]
        %v1530 = vld [vmem:[%s1516 + $0x68] sm:$0xff]
        %v1531 = vld [vmem:[%s1516 + $0x70] sm:$0xff]
        %v1532 = vld [vmem:[%s1516 + $0x78] sm:$0xff]
        %1533 = vmatprep.subr.mxu0 0.0
        %1534 = vmatpush1.msra.mxu0 %v1517
        %1535 = vmatprep.subr.mxu0 0.0
        %1536 = vmatpush1.msra.mxu0 %v1518
        %1537 = vmatprep.subr.mxu0 0.0
        %1538 = vmatpush1.msra.mxu0 %v1519
        %1539 = vmatprep.subr.mxu0 0.0
        %1540 = vmatpush1.msra.mxu0 %v1520
        %1541 = vmatprep.subr.mxu0 0.0
        %1542 = vmatpush1.msra.mxu0 %v1521
        %1543 = vmatprep.subr.mxu0 0.0
        %1544 = vmatpush1.msra.mxu0 %v1522
        %1545 = vmatprep.subr.mxu0 0.0
        %1546 = vmatpush1.msra.mxu0 %v1523
        %1547 = vmatprep.subr.mxu0 0.0
        %1548 = vmatpush1.msra.mxu0 %v1524
        %1549 = vmatprep.subr.mxu0 0.0
        %1550 = vmatpush1.msra.mxu0 %v1525
        %1551 = vmatprep.subr.mxu0 0.0
        %1552 = vmatpush1.msra.mxu0 %v1526
        %1553 = vmatprep.subr.mxu0 0.0
        %1554 = vmatpush1.msra.mxu0 %v1527
        %1555 = vmatprep.subr.mxu0 0.0
        %1556 = vmatpush1.msra.mxu0 %v1528
        %1557 = vmatprep.subr.mxu0 0.0
        %1558 = vmatpush1.msra.mxu0 %v1529
        %1559 = vmatprep.subr.mxu0 0.0
        %1560 = vmatpush1.msra.mxu0 %v1530
        %1561 = vmatprep.subr.mxu0 0.0
        %1562 = vmatpush1.msra.mxu0 %v1531
        %1563 = vmatprep.subr.mxu0 0.0
        %1564 = vmatpush1.msra.mxu0 %v1532
        %1565 = vmatprep.subr.mxu0 0.0
        %1566 = vmatpush1.msra.mxu0 0.0
        %1567 = vmatprep.subr.mxu0 0.0
        %1568 = vmatpush1.msra.mxu0 0.0
        %1569 = vmatprep.subr.mxu0 0.0
        %1570 = vmatpush1.msra.mxu0 0.0
        %1571 = vmatprep.subr.mxu0 0.0
        %1572 = vmatpush1.msra.mxu0 0.0
        %1573 = vmatprep.subr.mxu0 0.0
        %1574 = vmatpush1.msra.mxu0 0.0
        %1575 = vmatprep.subr.mxu0 0.0
        %1576 = vmatpush1.msra.mxu0 0.0
        %1577 = vmatprep.subr.mxu0 0.0
        %1578 = vmatpush1.msra.mxu0 0.0
        %1579 = vmatprep.subr.mxu0 0.0
        %1580 = vmatpush1.msra.mxu0 0.0
        %1581 = vmatprep.subr.mxu0 0.0
        %1582 = vmatpush1.msra.mxu0 0.0
        %1583 = vmatprep.subr.mxu0 0.0
        %1584 = vmatpush1.msra.mxu0 0.0
        %1585 = vmatprep.subr.mxu0 0.0
        %1586 = vmatpush1.msra.mxu0 0.0
        %1587 = vmatprep.subr.mxu0 0.0
        %1588 = vmatpush1.msra.mxu0 0.0
        %1589 = vmatprep.subr.mxu0 0.0
        %1590 = vmatpush1.msra.mxu0 0.0
        %1591 = vmatprep.subr.mxu0 0.0
        %1592 = vmatpush1.msra.mxu0 0.0
        %1593 = vmatprep.subr.mxu0 0.0
        %1594 = vmatpush1.msra.mxu0 0.0
        %1595 = vmatprep.subr.mxu0 0.0
        %1596 = vmatpush1.msra.mxu0 0.0
        %1597 = vmatprep.mubr.f32.mxu0 0.0
        %1598 = vmatmul.mubr.f32.gmra.mrb[0].mxu0 %v1250
        %v1599 = vpop.f32.mrb[0].mxu0
        %v1600 = vadd.f32 0.0, %v1599
        %v1601 = vpop.f32.mrb[0].mxu0
        %1602 = vdwg.mxu0
        %v1603 = vadd.f32 %v1515, %v1600
        %v1604 = vld [vmem:[%s13] sm:$0x1]
        %v1606 = vlaneseq
        %v1607 = vshrl.u32 %v1606, 7
        %v1608 = vsub.s32 0, %v1607
        %v1609 = vrot.slane %v1604, %v1608
        %v1611 = vadd.f32 %v1603, %v1609
        %1612 = vst [vmem:[%s576] sm:$0xff] %v1611
        %s1613 = sand.u32 %s313, 1
        %s1614 = scalar_lea.sflag [#allocation9], %s1613
        %s1615 = sand.u32 %s313, 1
        %s1616 = smul.addr %s1615, 32
        %s1617 = scalar_lea.vmem [#allocation21], %s1616
        %s1618 = sand.u32 %s339, 1
        %s1619 = scalar_lea.sflag [#allocation23], %s1618
        %s1620 = sand.u32 %s339, 1
        %s1621 = smul.addr %s1620, 8
        %s1622 = scalar_lea.vmem [#allocation22], %s1621
        // Predicated region
        $region101: #{tpu_custom_call.1} parent=67 // pred_check
          %p1623 = pneg %p323
        $region102: #{tpu_custom_call.1} parent=67 // pred_check_branch
          %1625 = sbr.rel (%p1623) target = $region104
        $region103: #{tpu_custom_call.1} parent=67 // pred_region
          %s1627 = ssub.s32 512, 512
          %1628 = vsyncadd %s1614, %s1627
          %s1629 = smul.addr %s48, 4
          %s1630 = smul.addr %s1629, 128
          %s1631 = scalar_lea.hbm %s14, %s1630
          %s1633 = sshll.u32 %s1617, 4
          %s1634 = int_to_ptr.vmem [resolvable:$true] %s1633
          %1636 = dma.vmem_to_hbm [thread:$0]  %s1634, 512, %s1631, %s1614
        $region104: #{tpu_custom_call.1} parent=67 // pred_fallthru
          _
        // Predicated region
        $region105: #{tpu_custom_call.1} parent=67 // pred_check
          %p1637 = pneg %p349
        $region106: #{tpu_custom_call.1} parent=67 // pred_check_branch
          %1639 = sbr.rel (%p1637) target = $region108
        $region107: #{tpu_custom_call.1} parent=67 // pred_region
          %s1641 = ssub.s32 128, 128
          %1642 = vsyncadd %s1619, %s1641
          %s1643 = smul.addr %s48, 128
          %s1644 = scalar_lea.hbm %s15, %s1643
          %s1646 = sshll.u32 %s1622, 4
          %s1647 = int_to_ptr.vmem [resolvable:$true] %s1646
          %1649 = dma.vmem_to_hbm [thread:$0]  %s1647, 128, %s1644, %s1619
        $region108: #{tpu_custom_call.1} parent=67 // pred_fallthru
          _
      $region68: #{tpu_custom_call.1} parent=5 // pred_fallthru
        _
      %p1650 = scmp.le.s32.totalorder 2, %s43
      // Predicated region
      $region109: #{tpu_custom_call.1} parent=5 // pred_check
        %p1651 = pneg %p1650
      $region110: #{tpu_custom_call.1} parent=5 // pred_check_branch
        %1653 = sbr.rel (%p1651) target = $region112
      $region111: #{tpu_custom_call.1} parent=5 // pred_region
        %s1654 = ssub.s32 %s43, 2
        // Predicated region
        $region113: #{tpu_custom_call.1} parent=111 // pred_check
          %p1655 = pneg %p329
        $region114: #{tpu_custom_call.1} parent=111 // pred_check_branch
          %1657 = sbr.rel (%p1655) target = $region116
        $region115: #{tpu_custom_call.1} parent=111 // pred_region
          %s1658 = sand.u32 %s314, 1
          %s1659 = scalar_lea.sflag [#allocation9], %s1658
          %s1660 = sand.u32 %s314, 1
          %s1661 = smul.addr %s1660, 32
          %s1662 = scalar_lea.vmem [#allocation21], %s1661
          %1663 = dma.done %s1659, 512
        $region116: #{tpu_custom_call.1} parent=111 // pred_fallthru
          _
        // Predicated region
        $region117: #{tpu_custom_call.1} parent=111 // pred_check
          %p1664 = pneg %p355
        $region118: #{tpu_custom_call.1} parent=111 // pred_check_branch
          %1666 = sbr.rel (%p1664) target = $region120
        $region119: #{tpu_custom_call.1} parent=111 // pred_region
          %s1667 = sand.u32 %s340, 1
          %s1668 = scalar_lea.sflag [#allocation23], %s1667
          %s1669 = sand.u32 %s340, 1
          %s1670 = smul.addr %s1669, 8
          %s1671 = scalar_lea.vmem [#allocation22], %s1670
          %1672 = dma.done %s1668, 128
        $region120: #{tpu_custom_call.1} parent=111 // pred_fallthru
          _
      $region112: #{tpu_custom_call.1} parent=5 // pred_fallthru
        _
    $region6: #{tpu_custom_call.1} parent=1 // loop_footer
      %s47 = sadd.s32 1, %s43
    $region7: #{tpu_custom_call.1} parent=1 // loop_footer_branch
      %42 = sbr.rel target = $region3
    $region8: #{tpu_custom_call.1} parent=1 // loop_exit
      _
    %1673 = vsyncpa [#allocation8], 1
    %s1674 = scalar_lea.sflag [#allocation8], 1
    %1675 = vsyncpa %s1674, 1
    %1676 = vsyncpa [#allocation11], 1
    %s1677 = scalar_lea.sflag [#allocation11], 1
    %1678 = vsyncpa %s1677, 1
    %1679 = vsyncpa [#allocation14], 1
    %1680 = vsyncpa [#allocation17], 1
    %1681 = vsyncpa [#allocation20], 1
    %1682 = vsyncpa [#allocation9], 1
    %s1683 = scalar_lea.sflag [#allocation9], 1
    %1684 = vsyncpa %s1683, 1
    %1685 = vsyncpa [#allocation23], 1
    %s1686 = scalar_lea.sflag [#allocation23], 1
    %1687 = vsyncpa %s1686, 1

</llo_original>
